<compile_context>
chip_gen: v5e
topology: v5e:2x2
jax: 0.10.0
libtpu: 0.0.40
codegen_flags: <defaults>
</compile_context>

<pallas_src>
import functools

import numpy as np
import jax
import jax.numpy as jnp
from jax.experimental import pallas as pl
from jax.experimental.pallas import tpu as pltpu


# ----------------------------------------------------------------------------
# Pallas kernel: fused dual grid_sample (separable bilinear) + attention blend.
# Each grid step handles `gb` (batch*group) slices.
# ----------------------------------------------------------------------------
def _sfc_warp_blend_kernel(feat_ref, side_ref, out_ref, *, cg, h, w, gb):
    # feat_ref : (gb, 2*cg*h, w)  rows [0, cg*h)      = cp (channel-major, y-minor)
    #                             rows [cg*h, 2*cg*h) = sp
    # side_ref : (gb, 6, S)       rows: ix_l, iy_l, ix_h, iy_h, att_sp, att_cp
    #                             (pixel-space coords; att rows already 1+tanh)
    # out_ref  : (gb, cg, S)      S = h*w (lane-dense, multiple of 128)
    s = h * w
    x_iota = jax.lax.broadcasted_iota(jnp.int32, (w, s), 0)   # source col index
    y_iota = jax.lax.broadcasted_iota(jnp.int32, (h, s), 0)   # source row index

    def separable_weights(ix, iy):
        # ix, iy: (1, S) pixel-space sample coordinates.
        # Returns RX (w, S), RY (h, S) so that the bilinear sample is
        #   out[c, p] = sum_{y,x} feat[c, y, x] * RY[y, p] * RX[x, p].
        # padding_mode='zeros': an out-of-range corner matches no source index
        # along that axis, so its contribution drops automatically.
        x0f = jnp.floor(ix)
        y0f = jnp.floor(iy)
        fx = ix - x0f
        fy = iy - y0f
        x0 = x0f.astype(jnp.int32)
        y0 = y0f.astype(jnp.int32)
        rx = (jnp.where(x_iota == x0, 1.0 - fx, 0.0)
              + jnp.where(x_iota == x0 + 1, fx, 0.0))
        ry = (jnp.where(y_iota == y0, 1.0 - fy, 0.0)
              + jnp.where(y_iota == y0 + 1, fy, 0.0))
        return rx, ry

    for gi in range(gb):                       # gb is small & static -> inlined
        side = side_ref[gi]                              # (6, S)
        feat = feat_ref[gi].astype(jnp.bfloat16)         # (2*cg*h, w)

        rx_l, ry_l = separable_weights(side[0:1, :], side[1:2, :])   # samples cp
        rx_h, ry_h = separable_weights(side[2:3, :], side[3:4, :])   # samples sp

        # Stage 1 (MXU, bf16 -> f32 acc): contract over source columns x.
        #   tmp[(c, y), p] = sum_x feat[c, y, x] * RX[x, p]
        tmp_cp = jnp.dot(feat[0:cg * h, :], rx_l.astype(jnp.bfloat16),
                         preferred_element_type=jnp.float32)          # (cg*h, S)
        tmp_sp = jnp.dot(feat[cg * h:, :], rx_h.astype(jnp.bfloat16),
                         preferred_element_type=jnp.float32)          # (cg*h, S)

        att_sp = side[4:5, :]     # multiplies warped sp
        att_cp = side[5:6, :]     # multiplies warped cp

        # Stage 2 (VPU): weighted reduction over source rows y + blend.
        rows = []
        for c in range(cg):
            wc = (tmp_cp[c * h:(c + 1) * h, :] * ry_l).sum(axis=0, keepdims=True)
            ws = (tmp_sp[c * h:(c + 1) * h, :] * ry_h).sum(axis=0, keepdims=True)
            rows.append(ws * att_sp + wc * att_cp)
        out_ref[gi] = jnp.concatenate(rows, axis=0).astype(out_ref.dtype)


# ----------------------------------------------------------------------------
# XLA glue: convs, align_corners bilinear upsample, offset -> pixel coords.
# ----------------------------------------------------------------------------
def _silu(x):
    return x * jax.nn.sigmoid(x)


def _conv2d(x, w):
    return jax.lax.conv_general_dilated(
        x, w, window_strides=(1, 1), padding="SAME",
        dimension_numbers=("NCHW", "OIHW", "NCHW"))


def _resize_matrix(in_size, out_size):
    # align_corners=True bilinear interpolation matrix (out_size, in_size).
    if out_size == 1:
        m = np.zeros((1, in_size), np.float32)
        m[0, 0] = 1.0
        return m
    m = np.zeros((out_size, in_size), np.float32)
    scale = (in_size - 1) / (out_size - 1)
    for i in range(out_size):
        src = i * scale
        i0 = min(int(np.floor(src)), in_size - 1)
        i1 = min(i0 + 1, in_size - 1)
        frac = src - i0
        m[i, i0] += 1.0 - frac
        m[i, i1] += frac
    return m


def _bilinear_resize_align_corners(x, out_h, out_w):
    # F.interpolate(mode='bilinear', align_corners=True) as two small matmuls.
    in_h, in_w = x.shape[-2:]
    if (in_h, in_w) == (out_h, out_w):
        return x
    rh = jnp.asarray(_resize_matrix(in_h, out_h))
    rw = jnp.asarray(_resize_matrix(in_w, out_w))
    x = jnp.einsum("oh,nchw->ncow", rh, x)
    x = jnp.einsum("pw,ncow->ncop", rw, x)
    return x


def _sfc_g2_frontend(x, params, groups=2):
    """Everything before the grid_sample/blend: returns cp, sp, coords, att."""
    sp, cp = x
    n, _, out_h, out_w = cp.shape

    # TODO(synk): Conv blocks are Conv2d + BatchNorm + SiLU in the repo; BN is
    # folded to identity (inference defaults) and the convs stay in XLA.
    sp = _silu(_conv2d(sp, params["w32"]))
    sp = _bilinear_resize_align_corners(sp, out_h, out_w)
    cp = _silu(_conv2d(cp, params["w8"]))

    hid = _silu(_conv2d(jnp.concatenate([cp, sp], axis=1), params["w_off0"]))
    conv_results = _conv2d(hid, params["w_off1"])       # (n, 4*groups+2, H, W)

    ng = n * groups
    off_l = conv_results[:, 0:2 * groups].reshape(ng, 2, out_h, out_w)
    off_h = conv_results[:, 2 * groups:4 * groups].reshape(ng, 2, out_h, out_w)
    att_raw = conv_results[:, 4 * groups:]               # (n, 2, H, W)

    # Base sampling grid in normalized [-1, 1] coords (exactly as the module
    # builds it), then unnormalized to pixel coords (align_corners=True).
    base_x = jnp.broadcast_to(
        jnp.linspace(-1.0, 1.0, out_w, dtype=jnp.float32)[None, :], (out_h, out_w))
    base_y = jnp.broadcast_to(
        jnp.linspace(-1.0, 1.0, out_h, dtype=jnp.float32)[:, None], (out_h, out_w))

    def to_pixel(off):
        gx = base_x[None] + off[:, 0] / float(out_w)
        gy = base_y[None] + off[:, 1] / float(out_h)
        ix = (gx + 1.0) * 0.5 * (out_w - 1)
        iy = (gy + 1.0) * 0.5 * (out_h - 1)
        return ix, iy

    ixl, iyl = to_pixel(off_l)
    ixh, iyh = to_pixel(off_h)
    coords = jnp.stack([ixl, iyl, ixh, iyh], axis=1)      # (ng, 4, H, W)
    att_g = jnp.repeat(att_raw, groups, axis=0)           # (ng, 2, H, W) pre-tanh
    return cp, sp, coords, att_g


# ----------------------------------------------------------------------------
# Pallas-accelerated forward.
# ----------------------------------------------------------------------------
def _pick_group_block(ng):
    # Batch several (batch*group) slices per grid step (amortize per-step
    # pipeline overhead on single-TC v5e/v6e) while keeping grid length >= 2
    # so v7x can still shard across both TensorCores.
    for cand in (8, 4, 2):
        if ng % cand == 0 and ng // cand >= 2:
            return cand
    return 1


def sfc_g2_forward(x, params, groups=2):
    cp, sp, coords, att_raw_g = _sfc_g2_frontend(x, params, groups)
    n, ouc, out_h, out_w = cp.shape
    assert ouc % groups == 0, "ouc must be divisible by groups"
    cg = ouc // groups
    ng = n * groups
    s = out_h * out_w
    gb = _pick_group_block(ng)

    # Per-group feature rows (channel-major, source-row y minor): (ng, cg*H, W),
    # cp rows then sp rows stacked into a single input block.
    cp_rows = cp.reshape(ng, cg * out_h, out_w)
    sp_rows = sp.reshape(ng, cg * out_h, out_w)
    feat = jnp.concatenate([cp_rows, sp_rows], axis=1)     # (ng, 2*cg*H, W)

    # Merged side input: 4 pixel-coord rows + 2 attention rows (tanh hoisted).
    att = 1.0 + jnp.tanh(att_raw_g)                        # (ng, 2, H, W)
    side = jnp.concatenate(
        [coords.reshape(ng, 4, s), att.reshape(ng, 2, s)], axis=1)   # (ng, 6, S)

    kernel = functools.partial(_sfc_warp_blend_kernel,
                               cg=cg, h=out_h, w=out_w, gb=gb)

    flops = ng * (2 * 2 * (cg * out_h) * out_w * s         # MXU stage-1 (x2 branches)
                  + 2 * 2 * cg * out_h * s                 # VPU stage-2
                  + 2 * 8 * (out_h + out_w) * s            # separable weight build
                  + 3 * cg * s)                            # blend
    bytes_accessed = 4 * ng * (2 * cg * out_h * out_w + 6 * s + cg * s)

    out_g = pl.pallas_call(
        kernel,
        out_shape=jax.ShapeDtypeStruct((ng, cg, s), jnp.float32),
        grid=(ng // gb,),
        in_specs=[
            pl.BlockSpec((gb, 2 * cg * out_h, out_w), lambda g: (g, 0, 0)),
            pl.BlockSpec((gb, 6, s), lambda g: (g, 0, 0)),
        ],
        out_specs=pl.BlockSpec((gb, cg, s), lambda g: (g, 0, 0)),
        compiler_params=pltpu.CompilerParams(
            dimension_semantics=("parallel",),
            vmem_limit_bytes=32 * 1024 * 1024),
        cost_estimate=pl.CostEstimate(
            flops=int(flops),
            transcendentals=0,
            bytes_accessed=int(bytes_accessed)),
    )(feat, side)

    return out_g.reshape(n, ouc, out_h, out_w)


# ----------------------------------------------------------------------------
# Pure-JAX reference (gather-based grid_sample) for verification.
# ----------------------------------------------------------------------------
def _grid_sample_ref(img, ix, iy):
    # img: (N, C, H, W); ix, iy: (N, Ho, Wo) pixel coords; bilinear, zeros pad.
    n, _, h, w = img.shape
    x0 = jnp.floor(ix)
    y0 = jnp.floor(iy)
    wx1 = ix - x0
    wy1 = iy - y0
    b = jnp.arange(n)[:, None, None]

    def pick(xf, yf, wgt):
        xi = xf.astype(jnp.int32)
        yi = yf.astype(jnp.int32)
        inb = ((xi >= 0) & (xi < w) & (yi >= 0) & (yi < h)).astype(img.dtype)
        xc = jnp.clip(xi, 0, w - 1)
        yc = jnp.clip(yi, 0, h - 1)
        v = img[b, :, yc, xc]                # (N, Ho, Wo, C)
        return jnp.moveaxis(v, -1, 1) * (wgt * inb)[:, None]

    return (pick(x0,     y0,     (1 - wx1) * (1 - wy1))
            + pick(x0 + 1, y0,     wx1 * (1 - wy1))
            + pick(x0,     y0 + 1, (1 - wx1) * wy1)
            + pick(x0 + 1, y0 + 1, wx1 * wy1))


def sfc_g2_reference(x, params, groups=2):
    cp, sp, coords, att_g = _sfc_g2_frontend(x, params, groups)
    n, ouc, out_h, out_w = cp.shape
    cg = ouc // groups
    ng = n * groups
    cp_g = cp.reshape(ng, cg, out_h, out_w)
    sp_g = sp.reshape(ng, cg, out_h, out_w)

    warped_cp = _grid_sample_ref(cp_g, coords[:, 0], coords[:, 1])
    warped_sp = _grid_sample_ref(sp_g, coords[:, 2], coords[:, 3])

    att = 1.0 + jnp.tanh(att_g)                               # (ng, 2, H, W)
    out_g = warped_sp * att[:, 0:1] + warped_cp * att[:, 1:2]
    return out_g.reshape(n, ouc, out_h, out_w)


# ----------------------------------------------------------------------------
# Main: small deterministic smoke test.
# ----------------------------------------------------------------------------
def _xavier(key, shape):
    fan_in = shape[1] * shape[2] * shape[3]
    fan_out = shape[0] * shape[2] * shape[3]
    std = float(np.sqrt(2.0 / (fan_in + fan_out)))
    return jax.random.normal(key, shape, jnp.float32) * std


if __name__ == "__main__":
    key = jax.random.PRNGKey(0)
    n = 2
    inc = (8, 6)          # (channels of sp, channels of cp)
    ouc = 8
    groups = 2
    out_h, out_w = 16, 16

    k = jax.random.split(key, 6)
    sp_in = jax.random.normal(k[0], (n, inc[0], 8, 8), jnp.float32)
    cp_in = jax.random.normal(k[1], (n, inc[1], out_h, out_w), jnp.float32)

    params = {
        "w32":   _xavier(k[2], (ouc, inc[0], 3, 3)),
        "w8":    _xavier(k[3], (ouc, inc[1], 3, 3)),
        "w_off0": _xavier(k[4], (64, 2 * ouc, 1, 1)),
        # The module zero-inits this conv; we use small nonzero weights so the
        # warp path is actually exercised (forward semantics are weight-agnostic).
        "w_off1": _xavier(k[5], (4 * groups + 2, 64, 3, 3)),
    }

    out = sfc_g2_forward((sp_in, cp_in), params, groups=groups)
    out = jax.block_until_ready(out)
    assert out.shape == (n, ouc, out_h, out_w), out.shape

    ref = sfc_g2_reference((sp_in, cp_in), params, groups=groups)
    # bf16 MXU operands (features + separable weights) vs. the full-f32 gather
    # reference -> loose-ish tolerance.
    np.testing.assert_allclose(np.asarray(out), np.asarray(ref),
                               rtol=3e-2, atol=3e-2)
    print("KERNEL_OK")
</pallas_src>

<mosaic_0001>
module attributes {stable_mosaic.version = 11 : i64} {
  func.func @_sfc_warp_blend_kernel(%arg0: i32, %arg1: memref<2x128x16xf32, #tpu.memory_space<vmem>>, %arg2: memref<2x6x256xf32, #tpu.memory_space<vmem>>, %arg3: memref<2x4x256xf32, #tpu.memory_space<vmem>>) attributes {dimension_semantics = [#tpu.dimension_semantics<parallel>], iteration_bounds = array<i64: 2>, scalar_prefetch = 0 : i64, scratch_operands = 0 : i64, tpu.core_type = #tpu.core_type<tc>, window_params = [{transform_indices = @transform_0, window_bounds = array<i64: 2, 128, 16>}, {transform_indices = @transform_1, window_bounds = array<i64: 2, 6, 256>}, {transform_indices = @transform_2, window_bounds = array<i64: 2, 4, 256>}]} {
    %0 = tpu.iota {dimensions = array<i32: 0>} : vector<16x256xi32>
    %1 = tpu.iota {dimensions = array<i32: 0>} : vector<16x256xi32>
    %c0 = arith.constant 0 : index
    %c0_0 = arith.constant 0 : index
    %c0_1 = arith.constant 0 : index
    %2 = vector.load %arg2[%c0, %c0_0, %c0_1] : memref<2x6x256xf32, #tpu.memory_space<vmem>>, vector<1x6x256xf32>
    %3 = vector.shape_cast %2 : vector<1x6x256xf32> to vector<6x256xf32>
    %c0_2 = arith.constant 0 : index
    %c0_3 = arith.constant 0 : index
    %c0_4 = arith.constant 0 : index
    %4 = vector.load %arg1[%c0_2, %c0_3, %c0_4] : memref<2x128x16xf32, #tpu.memory_space<vmem>>, vector<1x128x16xf32>
    %5 = vector.shape_cast %4 : vector<1x128x16xf32> to vector<128x16xf32>
    %6 = arith.truncf %5 : vector<128x16xf32> to vector<128x16xbf16>
    %7 = vector.extract_strided_slice %3 {offsets = [0, 0], sizes = [1, 256], strides = [1, 1]} : vector<6x256xf32> to vector<1x256xf32>
    %8 = vector.extract_strided_slice %3 {offsets = [1, 0], sizes = [1, 256], strides = [1, 1]} : vector<6x256xf32> to vector<1x256xf32>
    %9 = math.floor %7 : vector<1x256xf32>
    %10 = math.floor %8 : vector<1x256xf32>
    %11 = arith.subf %7, %9 : vector<1x256xf32>
    %12 = arith.subf %8, %10 : vector<1x256xf32>
    %13 = arith.fptosi %9 : vector<1x256xf32> to vector<1x256xi32>
    %14 = arith.fptosi %10 : vector<1x256xf32> to vector<1x256xi32>
    %15 = vector.broadcast %13 : vector<1x256xi32> to vector<16x256xi32>
    %16 = arith.cmpi eq, %0, %15 : vector<16x256xi32>
    %cst = arith.constant 1.000000e+00 : f32
    %17 = vector.broadcast %cst : f32 to vector<1x256xf32>
    %18 = arith.subf %17, %11 : vector<1x256xf32>
    %cst_5 = arith.constant 0.000000e+00 : f32
    %19 = vector.shape_cast %18 : vector<1x256xf32> to vector<1x256xf32>
    %20 = vector.broadcast %19 : vector<1x256xf32> to vector<16x256xf32>
    %21 = vector.broadcast %cst_5 : f32 to vector<16x256xf32>
    %22 = arith.select %16, %20, %21 : vector<16x256xi1>, vector<16x256xf32>
    %c1_i32 = arith.constant 1 : i32
    %23 = vector.broadcast %c1_i32 : i32 to vector<1x256xi32>
    %24 = arith.addi %13, %23 : vector<1x256xi32>
    %25 = vector.broadcast %24 : vector<1x256xi32> to vector<16x256xi32>
    %26 = arith.cmpi eq, %0, %25 : vector<16x256xi32>
    %cst_6 = arith.constant 0.000000e+00 : f32
    %27 = vector.shape_cast %11 : vector<1x256xf32> to vector<1x256xf32>
    %28 = vector.broadcast %27 : vector<1x256xf32> to vector<16x256xf32>
    %29 = vector.broadcast %cst_6 : f32 to vector<16x256xf32>
    %30 = arith.select %26, %28, %29 : vector<16x256xi1>, vector<16x256xf32>
    %31 = arith.addf %22, %30 : vector<16x256xf32>
    %32 = vector.broadcast %14 : vector<1x256xi32> to vector<16x256xi32>
    %33 = arith.cmpi eq, %1, %32 : vector<16x256xi32>
    %cst_7 = arith.constant 1.000000e+00 : f32
    %34 = vector.broadcast %cst_7 : f32 to vector<1x256xf32>
    %35 = arith.subf %34, %12 : vector<1x256xf32>
    %cst_8 = arith.constant 0.000000e+00 : f32
    %36 = vector.shape_cast %35 : vector<1x256xf32> to vector<1x256xf32>
    %37 = vector.broadcast %36 : vector<1x256xf32> to vector<16x256xf32>
    %38 = vector.broadcast %cst_8 : f32 to vector<16x256xf32>
    %39 = arith.select %33, %37, %38 : vector<16x256xi1>, vector<16x256xf32>
    %c1_i32_9 = arith.constant 1 : i32
    %40 = vector.broadcast %c1_i32_9 : i32 to vector<1x256xi32>
    %41 = arith.addi %14, %40 : vector<1x256xi32>
    %42 = vector.broadcast %41 : vector<1x256xi32> to vector<16x256xi32>
    %43 = arith.cmpi eq, %1, %42 : vector<16x256xi32>
    %cst_10 = arith.constant 0.000000e+00 : f32
    %44 = vector.shape_cast %12 : vector<1x256xf32> to vector<1x256xf32>
    %45 = vector.broadcast %44 : vector<1x256xf32> to vector<16x256xf32>
    %46 = vector.broadcast %cst_10 : f32 to vector<16x256xf32>
    %47 = arith.select %43, %45, %46 : vector<16x256xi1>, vector<16x256xf32>
    %48 = arith.addf %39, %47 : vector<16x256xf32>
    %49 = vector.extract_strided_slice %3 {offsets = [2, 0], sizes = [1, 256], strides = [1, 1]} : vector<6x256xf32> to vector<1x256xf32>
    %50 = vector.extract_strided_slice %3 {offsets = [3, 0], sizes = [1, 256], strides = [1, 1]} : vector<6x256xf32> to vector<1x256xf32>
    %51 = math.floor %49 : vector<1x256xf32>
    %52 = math.floor %50 : vector<1x256xf32>
    %53 = arith.subf %49, %51 : vector<1x256xf32>
    %54 = arith.subf %50, %52 : vector<1x256xf32>
    %55 = arith.fptosi %51 : vector<1x256xf32> to vector<1x256xi32>
    %56 = arith.fptosi %52 : vector<1x256xf32> to vector<1x256xi32>
    %57 = vector.broadcast %55 : vector<1x256xi32> to vector<16x256xi32>
    %58 = arith.cmpi eq, %0, %57 : vector<16x256xi32>
    %cst_11 = arith.constant 1.000000e+00 : f32
    %59 = vector.broadcast %cst_11 : f32 to vector<1x256xf32>
    %60 = arith.subf %59, %53 : vector<1x256xf32>
    %cst_12 = arith.constant 0.000000e+00 : f32
    %61 = vector.shape_cast %60 : vector<1x256xf32> to vector<1x256xf32>
    %62 = vector.broadcast %61 : vector<1x256xf32> to vector<16x256xf32>
    %63 = vector.broadcast %cst_12 : f32 to vector<16x256xf32>
    %64 = arith.select %58, %62, %63 : vector<16x256xi1>, vector<16x256xf32>
    %c1_i32_13 = arith.constant 1 : i32
    %65 = vector.broadcast %c1_i32_13 : i32 to vector<1x256xi32>
    %66 = arith.addi %55, %65 : vector<1x256xi32>
    %67 = vector.broadcast %66 : vector<1x256xi32> to vector<16x256xi32>
    %68 = arith.cmpi eq, %0, %67 : vector<16x256xi32>
    %cst_14 = arith.constant 0.000000e+00 : f32
    %69 = vector.shape_cast %53 : vector<1x256xf32> to vector<1x256xf32>
    %70 = vector.broadcast %69 : vector<1x256xf32> to vector<16x256xf32>
    %71 = vector.broadcast %cst_14 : f32 to vector<16x256xf32>
    %72 = arith.select %68, %70, %71 : vector<16x256xi1>, vector<16x256xf32>
    %73 = arith.addf %64, %72 : vector<16x256xf32>
    %74 = vector.broadcast %56 : vector<1x256xi32> to vector<16x256xi32>
    %75 = arith.cmpi eq, %1, %74 : vector<16x256xi32>
    %cst_15 = arith.constant 1.000000e+00 : f32
    %76 = vector.broadcast %cst_15 : f32 to vector<1x256xf32>
    %77 = arith.subf %76, %54 : vector<1x256xf32>
    %cst_16 = arith.constant 0.000000e+00 : f32
    %78 = vector.shape_cast %77 : vector<1x256xf32> to vector<1x256xf32>
    %79 = vector.broadcast %78 : vector<1x256xf32> to vector<16x256xf32>
    %80 = vector.broadcast %cst_16 : f32 to vector<16x256xf32>
    %81 = arith.select %75, %79, %80 : vector<16x256xi1>, vector<16x256xf32>
    %c1_i32_17 = arith.constant 1 : i32
    %82 = vector.broadcast %c1_i32_17 : i32 to vector<1x256xi32>
    %83 = arith.addi %56, %82 : vector<1x256xi32>
    %84 = vector.broadcast %83 : vector<1x256xi32> to vector<16x256xi32>
    %85 = arith.cmpi eq, %1, %84 : vector<16x256xi32>
    %cst_18 = arith.constant 0.000000e+00 : f32
    %86 = vector.shape_cast %54 : vector<1x256xf32> to vector<1x256xf32>
    %87 = vector.broadcast %86 : vector<1x256xf32> to vector<16x256xf32>
    %88 = vector.broadcast %cst_18 : f32 to vector<16x256xf32>
    %89 = arith.select %85, %87, %88 : vector<16x256xi1>, vector<16x256xf32>
    %90 = arith.addf %81, %89 : vector<16x256xf32>
    %91 = vector.extract_strided_slice %6 {offsets = [0, 0], sizes = [64, 16], strides = [1, 1]} : vector<128x16xbf16> to vector<64x16xbf16>
    %92 = arith.truncf %31 : vector<16x256xf32> to vector<16x256xbf16>
    %cst_19 = arith.constant dense<0.000000e+00> : vector<64x256xf32>
    %93 = tpu.matmul %91, %92, %cst_19 {dimension_numbers = #tpu.dot_dimension_numbers<[1], [0], [0], [1], [0, 0, 1, 1], [], []>} : vector<64x16xbf16>, vector<16x256xbf16>, vector<64x256xf32> -> vector<64x256xf32>
    %94 = vector.extract_strided_slice %6 {offsets = [64, 0], sizes = [64, 16], strides = [1, 1]} : vector<128x16xbf16> to vector<64x16xbf16>
    %95 = arith.truncf %73 : vector<16x256xf32> to vector<16x256xbf16>
    %cst_20 = arith.constant dense<0.000000e+00> : vector<64x256xf32>
    %96 = tpu.matmul %94, %95, %cst_20 {dimension_numbers = #tpu.dot_dimension_numbers<[1], [0], [0], [1], [0, 0, 1, 1], [], []>} : vector<64x16xbf16>, vector<16x256xbf16>, vector<64x256xf32> -> vector<64x256xf32>
    %97 = vector.extract_strided_slice %3 {offsets = [4, 0], sizes = [1, 256], strides = [1, 1]} : vector<6x256xf32> to vector<1x256xf32>
    %98 = vector.extract_strided_slice %3 {offsets = [5, 0], sizes = [1, 256], strides = [1, 1]} : vector<6x256xf32> to vector<1x256xf32>
    %99 = vector.extract_strided_slice %93 {offsets = [0, 0], sizes = [16, 256], strides = [1, 1]} : vector<64x256xf32> to vector<16x256xf32>
    %100 = arith.mulf %99, %48 : vector<16x256xf32>
    %cst_21 = arith.constant dense<0.000000e+00> : vector<256xf32>
    %101 = vector.multi_reduction <add>, %100, %cst_21 [0] : vector<16x256xf32> to vector<256xf32>
    %102 = vector.shape_cast %101 : vector<256xf32> to vector<1x256xf32>
    %103 = vector.extract_strided_slice %96 {offsets = [0, 0], sizes = [16, 256], strides = [1, 1]} : vector<64x256xf32> to vector<16x256xf32>
    %104 = arith.mulf %103, %90 : vector<16x256xf32>
    %cst_22 = arith.constant dense<0.000000e+00> : vector<256xf32>
    %105 = vector.multi_reduction <add>, %104, %cst_22 [0] : vector<16x256xf32> to vector<256xf32>
    %106 = vector.shape_cast %105 : vector<256xf32> to vector<1x256xf32>
    %107 = arith.mulf %106, %97 : vector<1x256xf32>
    %108 = arith.mulf %102, %98 : vector<1x256xf32>
    %109 = arith.addf %107, %108 : vector<1x256xf32>
    %110 = vector.extract_strided_slice %93 {offsets = [16, 0], sizes = [16, 256], strides = [1, 1]} : vector<64x256xf32> to vector<16x256xf32>
    %111 = arith.mulf %110, %48 : vector<16x256xf32>
    %cst_23 = arith.constant dense<0.000000e+00> : vector<256xf32>
    %112 = vector.multi_reduction <add>, %111, %cst_23 [0] : vector<16x256xf32> to vector<256xf32>
    %113 = vector.shape_cast %112 : vector<256xf32> to vector<1x256xf32>
    %114 = vector.extract_strided_slice %96 {offsets = [16, 0], sizes = [16, 256], strides = [1, 1]} : vector<64x256xf32> to vector<16x256xf32>
    %115 = arith.mulf %114, %90 : vector<16x256xf32>
    %cst_24 = arith.constant dense<0.000000e+00> : vector<256xf32>
    %116 = vector.multi_reduction <add>, %115, %cst_24 [0] : vector<16x256xf32> to vector<256xf32>
    %117 = vector.shape_cast %116 : vector<256xf32> to vector<1x256xf32>
    %118 = arith.mulf %117, %97 : vector<1x256xf32>
    %119 = arith.mulf %113, %98 : vector<1x256xf32>
    %120 = arith.addf %118, %119 : vector<1x256xf32>
    %121 = vector.extract_strided_slice %93 {offsets = [32, 0], sizes = [16, 256], strides = [1, 1]} : vector<64x256xf32> to vector<16x256xf32>
    %122 = arith.mulf %121, %48 : vector<16x256xf32>
    %cst_25 = arith.constant dense<0.000000e+00> : vector<256xf32>
    %123 = vector.multi_reduction <add>, %122, %cst_25 [0] : vector<16x256xf32> to vector<256xf32>
    %124 = vector.shape_cast %123 : vector<256xf32> to vector<1x256xf32>
    %125 = vector.extract_strided_slice %96 {offsets = [32, 0], sizes = [16, 256], strides = [1, 1]} : vector<64x256xf32> to vector<16x256xf32>
    %126 = arith.mulf %125, %90 : vector<16x256xf32>
    %cst_26 = arith.constant dense<0.000000e+00> : vector<256xf32>
    %127 = vector.multi_reduction <add>, %126, %cst_26 [0] : vector<16x256xf32> to vector<256xf32>
    %128 = vector.shape_cast %127 : vector<256xf32> to vector<1x256xf32>
    %129 = arith.mulf %128, %97 : vector<1x256xf32>
    %130 = arith.mulf %124, %98 : vector<1x256xf32>
    %131 = arith.addf %129, %130 : vector<1x256xf32>
    %132 = vector.extract_strided_slice %93 {offsets = [48, 0], sizes = [16, 256], strides = [1, 1]} : vector<64x256xf32> to vector<16x256xf32>
    %133 = arith.mulf %132, %48 : vector<16x256xf32>
    %cst_27 = arith.constant dense<0.000000e+00> : vector<256xf32>
    %134 = vector.multi_reduction <add>, %133, %cst_27 [0] : vector<16x256xf32> to vector<256xf32>
    %135 = vector.shape_cast %134 : vector<256xf32> to vector<1x256xf32>
    %136 = vector.extract_strided_slice %96 {offsets = [48, 0], sizes = [16, 256], strides = [1, 1]} : vector<64x256xf32> to vector<16x256xf32>
    %137 = arith.mulf %136, %90 : vector<16x256xf32>
    %cst_28 = arith.constant dense<0.000000e+00> : vector<256xf32>
    %138 = vector.multi_reduction <add>, %137, %cst_28 [0] : vector<16x256xf32> to vector<256xf32>
    %139 = vector.shape_cast %138 : vector<256xf32> to vector<1x256xf32>
    %140 = arith.mulf %139, %97 : vector<1x256xf32>
    %141 = arith.mulf %135, %98 : vector<1x256xf32>
    %142 = arith.addf %140, %141 : vector<1x256xf32>
    %143 = tpu.concatenate %109, %120, %131, %142 in 0 : vector<1x256xf32>, vector<1x256xf32>, vector<1x256xf32>, vector<1x256xf32> -> vector<4x256xf32>
    %c0_29 = arith.constant 0 : index
    %c0_30 = arith.constant 0 : index
    %c0_31 = arith.constant 0 : index
    %144 = vector.load %arg3[%c0_29, %c0_30, %c0_31] : memref<2x4x256xf32, #tpu.memory_space<vmem>>, vector<1x4x256xf32>
    %145 = vector.shape_cast %144 : vector<1x4x256xf32> to vector<4x256xf32>
    %146 = vector.shape_cast %143 : vector<4x256xf32> to vector<1x4x256xf32>
    tpu.vector_store %arg3[%c0_29, %c0_30, %c0_31], %146 {strides = array<i32>} : memref<2x4x256xf32, #tpu.memory_space<vmem>>, vector<1x4x256xf32>,
    %c1 = arith.constant 1 : index
    %c0_32 = arith.constant 0 : index
    %c0_33 = arith.constant 0 : index
    %147 = vector.load %arg2[%c1, %c0_32, %c0_33] : memref<2x6x256xf32, #tpu.memory_space<vmem>>, vector<1x6x256xf32>
    %148 = vector.shape_cast %147 : vector<1x6x256xf32> to vector<6x256xf32>
    %c1_34 = arith.constant 1 : index
    %c0_35 = arith.constant 0 : index
    %c0_36 = arith.constant 0 : index
    %149 = vector.load %arg1[%c1_34, %c0_35, %c0_36] : memref<2x128x16xf32, #tpu.memory_space<vmem>>, vector<1x128x16xf32>
    %150 = vector.shape_cast %149 : vector<1x128x16xf32> to vector<128x16xf32>
    %151 = arith.truncf %150 : vector<128x16xf32> to vector<128x16xbf16>
    %152 = vector.extract_strided_slice %148 {offsets = [0, 0], sizes = [1, 256], strides = [1, 1]} : vector<6x256xf32> to vector<1x256xf32>
    %153 = vector.extract_strided_slice %148 {offsets = [1, 0], sizes = [1, 256], strides = [1, 1]} : vector<6x256xf32> to vector<1x256xf32>
    %154 = math.floor %152 : vector<1x256xf32>
    %155 = math.floor %153 : vector<1x256xf32>
    %156 = arith.subf %152, %154 : vector<1x256xf32>
    %157 = arith.subf %153, %155 : vector<1x256xf32>
    %158 = arith.fptosi %154 : vector<1x256xf32> to vector<1x256xi32>
    %159 = arith.fptosi %155 : vector<1x256xf32> to vector<1x256xi32>
    %160 = vector.broadcast %158 : vector<1x256xi32> to vector<16x256xi32>
    %161 = arith.cmpi eq, %0, %160 : vector<16x256xi32>
    %cst_37 = arith.constant 1.000000e+00 : f32
    %162 = vector.broadcast %cst_37 : f32 to vector<1x256xf32>
    %163 = arith.subf %162, %156 : vector<1x256xf32>
    %cst_38 = arith.constant 0.000000e+00 : f32
    %164 = vector.shape_cast %163 : vector<1x256xf32> to vector<1x256xf32>
    %165 = vector.broadcast %164 : vector<1x256xf32> to vector<16x256xf32>
    %166 = vector.broadcast %cst_38 : f32 to vector<16x256xf32>
    %167 = arith.select %161, %165, %166 : vector<16x256xi1>, vector<16x256xf32>
    %c1_i32_39 = arith.constant 1 : i32
    %168 = vector.broadcast %c1_i32_39 : i32 to vector<1x256xi32>
    %169 = arith.addi %158, %168 : vector<1x256xi32>
    %170 = vector.broadcast %169 : vector<1x256xi32> to vector<16x256xi32>
    %171 = arith.cmpi eq, %0, %170 : vector<16x256xi32>
    %cst_40 = arith.constant 0.000000e+00 : f32
    %172 = vector.shape_cast %156 : vector<1x256xf32> to vector<1x256xf32>
    %173 = vector.broadcast %172 : vector<1x256xf32> to vector<16x256xf32>
    %174 = vector.broadcast %cst_40 : f32 to vector<16x256xf32>
    %175 = arith.select %171, %173, %174 : vector<16x256xi1>, vector<16x256xf32>
    %176 = arith.addf %167, %175 : vector<16x256xf32>
    %177 = vector.broadcast %159 : vector<1x256xi32> to vector<16x256xi32>
    %178 = arith.cmpi eq, %1, %177 : vector<16x256xi32>
    %cst_41 = arith.constant 1.000000e+00 : f32
    %179 = vector.broadcast %cst_41 : f32 to vector<1x256xf32>
    %180 = arith.subf %179, %157 : vector<1x256xf32>
    %cst_42 = arith.constant 0.000000e+00 : f32
    %181 = vector.shape_cast %180 : vector<1x256xf32> to vector<1x256xf32>
    %182 = vector.broadcast %181 : vector<1x256xf32> to vector<16x256xf32>
    %183 = vector.broadcast %cst_42 : f32 to vector<16x256xf32>
    %184 = arith.select %178, %182, %183 : vector<16x256xi1>, vector<16x256xf32>
    %c1_i32_43 = arith.constant 1 : i32
    %185 = vector.broadcast %c1_i32_43 : i32 to vector<1x256xi32>
    %186 = arith.addi %159, %185 : vector<1x256xi32>
    %187 = vector.broadcast %186 : vector<1x256xi32> to vector<16x256xi32>
    %188 = arith.cmpi eq, %1, %187 : vector<16x256xi32>
    %cst_44 = arith.constant 0.000000e+00 : f32
    %189 = vector.shape_cast %157 : vector<1x256xf32> to vector<1x256xf32>
    %190 = vector.broadcast %189 : vector<1x256xf32> to vector<16x256xf32>
    %191 = vector.broadcast %cst_44 : f32 to vector<16x256xf32>
    %192 = arith.select %188, %190, %191 : vector<16x256xi1>, vector<16x256xf32>
    %193 = arith.addf %184, %192 : vector<16x256xf32>
    %194 = vector.extract_strided_slice %148 {offsets = [2, 0], sizes = [1, 256], strides = [1, 1]} : vector<6x256xf32> to vector<1x256xf32>
    %195 = vector.extract_strided_slice %148 {offsets = [3, 0], sizes = [1, 256], strides = [1, 1]} : vector<6x256xf32> to vector<1x256xf32>
    %196 = math.floor %194 : vector<1x256xf32>
    %197 = math.floor %195 : vector<1x256xf32>
    %198 = arith.subf %194, %196 : vector<1x256xf32>
    %199 = arith.subf %195, %197 : vector<1x256xf32>
    %200 = arith.fptosi %196 : vector<1x256xf32> to vector<1x256xi32>
    %201 = arith.fptosi %197 : vector<1x256xf32> to vector<1x256xi32>
    %202 = vector.broadcast %200 : vector<1x256xi32> to vector<16x256xi32>
    %203 = arith.cmpi eq, %0, %202 : vector<16x256xi32>
    %cst_45 = arith.constant 1.000000e+00 : f32
    %204 = vector.broadcast %cst_45 : f32 to vector<1x256xf32>
    %205 = arith.subf %204, %198 : vector<1x256xf32>
    %cst_46 = arith.constant 0.000000e+00 : f32
    %206 = vector.shape_cast %205 : vector<1x256xf32> to vector<1x256xf32>
    %207 = vector.broadcast %206 : vector<1x256xf32> to vector<16x256xf32>
    %208 = vector.broadcast %cst_46 : f32 to vector<16x256xf32>
    %209 = arith.select %203, %207, %208 : vector<16x256xi1>, vector<16x256xf32>
    %c1_i32_47 = arith.constant 1 : i32
    %210 = vector.broadcast %c1_i32_47 : i32 to vector<1x256xi32>
    %211 = arith.addi %200, %210 : vector<1x256xi32>
    %212 = vector.broadcast %211 : vector<1x256xi32> to vector<16x256xi32>
    %213 = arith.cmpi eq, %0, %212 : vector<16x256xi32>
    %cst_48 = arith.constant 0.000000e+00 : f32
    %214 = vector.shape_cast %198 : vector<1x256xf32> to vector<1x256xf32>
    %215 = vector.broadcast %214 : vector<1x256xf32> to vector<16x256xf32>
    %216 = vector.broadcast %cst_48 : f32 to vector<16x256xf32>
    %217 = arith.select %213, %215, %216 : vector<16x256xi1>, vector<16x256xf32>
    %218 = arith.addf %209, %217 : vector<16x256xf32>
    %219 = vector.broadcast %201 : vector<1x256xi32> to vector<16x256xi32>
    %220 = arith.cmpi eq, %1, %219 : vector<16x256xi32>
    %cst_49 = arith.constant 1.000000e+00 : f32
    %221 = vector.broadcast %cst_49 : f32 to vector<1x256xf32>
    %222 = arith.subf %221, %199 : vector<1x256xf32>
    %cst_50 = arith.constant 0.000000e+00 : f32
    %223 = vector.shape_cast %222 : vector<1x256xf32> to vector<1x256xf32>
    %224 = vector.broadcast %223 : vector<1x256xf32> to vector<16x256xf32>
    %225 = vector.broadcast %cst_50 : f32 to vector<16x256xf32>
    %226 = arith.select %220, %224, %225 : vector<16x256xi1>, vector<16x256xf32>
    %c1_i32_51 = arith.constant 1 : i32
    %227 = vector.broadcast %c1_i32_51 : i32 to vector<1x256xi32>
    %228 = arith.addi %201, %227 : vector<1x256xi32>
    %229 = vector.broadcast %228 : vector<1x256xi32> to vector<16x256xi32>
    %230 = arith.cmpi eq, %1, %229 : vector<16x256xi32>
    %cst_52 = arith.constant 0.000000e+00 : f32
    %231 = vector.shape_cast %199 : vector<1x256xf32> to vector<1x256xf32>
    %232 = vector.broadcast %231 : vector<1x256xf32> to vector<16x256xf32>
    %233 = vector.broadcast %cst_52 : f32 to vector<16x256xf32>
    %234 = arith.select %230, %232, %233 : vector<16x256xi1>, vector<16x256xf32>
    %235 = arith.addf %226, %234 : vector<16x256xf32>
    %236 = vector.extract_strided_slice %151 {offsets = [0, 0], sizes = [64, 16], strides = [1, 1]} : vector<128x16xbf16> to vector<64x16xbf16>
    %237 = arith.truncf %176 : vector<16x256xf32> to vector<16x256xbf16>
    %cst_53 = arith.constant dense<0.000000e+00> : vector<64x256xf32>
    %238 = tpu.matmul %236, %237, %cst_53 {dimension_numbers = #tpu.dot_dimension_numbers<[1], [0], [0], [1], [0, 0, 1, 1], [], []>} : vector<64x16xbf16>, vector<16x256xbf16>, vector<64x256xf32> -> vector<64x256xf32>
    %239 = vector.extract_strided_slice %151 {offsets = [64, 0], sizes = [64, 16], strides = [1, 1]} : vector<128x16xbf16> to vector<64x16xbf16>
    %240 = arith.truncf %218 : vector<16x256xf32> to vector<16x256xbf16>
    %cst_54 = arith.constant dense<0.000000e+00> : vector<64x256xf32>
    %241 = tpu.matmul %239, %240, %cst_54 {dimension_numbers = #tpu.dot_dimension_numbers<[1], [0], [0], [1], [0, 0, 1, 1], [], []>} : vector<64x16xbf16>, vector<16x256xbf16>, vector<64x256xf32> -> vector<64x256xf32>
    %242 = vector.extract_strided_slice %148 {offsets = [4, 0], sizes = [1, 256], strides = [1, 1]} : vector<6x256xf32> to vector<1x256xf32>
    %243 = vector.extract_strided_slice %148 {offsets = [5, 0], sizes = [1, 256], strides = [1, 1]} : vector<6x256xf32> to vector<1x256xf32>
    %244 = vector.extract_strided_slice %238 {offsets = [0, 0], sizes = [16, 256], strides = [1, 1]} : vector<64x256xf32> to vector<16x256xf32>
    %245 = arith.mulf %244, %193 : vector<16x256xf32>
    %cst_55 = arith.constant dense<0.000000e+00> : vector<256xf32>
    %246 = vector.multi_reduction <add>, %245, %cst_55 [0] : vector<16x256xf32> to vector<256xf32>
    %247 = vector.shape_cast %246 : vector<256xf32> to vector<1x256xf32>
    %248 = vector.extract_strided_slice %241 {offsets = [0, 0], sizes = [16, 256], strides = [1, 1]} : vector<64x256xf32> to vector<16x256xf32>
    %249 = arith.mulf %248, %235 : vector<16x256xf32>
    %cst_56 = arith.constant dense<0.000000e+00> : vector<256xf32>
    %250 = vector.multi_reduction <add>, %249, %cst_56 [0] : vector<16x256xf32> to vector<256xf32>
    %251 = vector.shape_cast %250 : vector<256xf32> to vector<1x256xf32>
    %252 = arith.mulf %251, %242 : vector<1x256xf32>
    %253 = arith.mulf %247, %243 : vector<1x256xf32>
    %254 = arith.addf %252, %253 : vector<1x256xf32>
    %255 = vector.extract_strided_slice %238 {offsets = [16, 0], sizes = [16, 256], strides = [1, 1]} : vector<64x256xf32> to vector<16x256xf32>
    %256 = arith.mulf %255, %193 : vector<16x256xf32>
    %cst_57 = arith.constant dense<0.000000e+00> : vector<256xf32>
    %257 = vector.multi_reduction <add>, %256, %cst_57 [0] : vector<16x256xf32> to vector<256xf32>
    %258 = vector.shape_cast %257 : vector<256xf32> to vector<1x256xf32>
    %259 = vector.extract_strided_slice %241 {offsets = [16, 0], sizes = [16, 256], strides = [1, 1]} : vector<64x256xf32> to vector<16x256xf32>
    %260 = arith.mulf %259, %235 : vector<16x256xf32>
    %cst_58 = arith.constant dense<0.000000e+00> : vector<256xf32>
    %261 = vector.multi_reduction <add>, %260, %cst_58 [0] : vector<16x256xf32> to vector<256xf32>
    %262 = vector.shape_cast %261 : vector<256xf32> to vector<1x256xf32>
    %263 = arith.mulf %262, %242 : vector<1x256xf32>
    %264 = arith.mulf %258, %243 : vector<1x256xf32>
    %265 = arith.addf %263, %264 : vector<1x256xf32>
    %266 = vector.extract_strided_slice %238 {offsets = [32, 0], sizes = [16, 256], strides = [1, 1]} : vector<64x256xf32> to vector<16x256xf32>
    %267 = arith.mulf %266, %193 : vector<16x256xf32>
    %cst_59 = arith.constant dense<0.000000e+00> : vector<256xf32>
    %268 = vector.multi_reduction <add>, %267, %cst_59 [0] : vector<16x256xf32> to vector<256xf32>
    %269 = vector.shape_cast %268 : vector<256xf32> to vector<1x256xf32>
    %270 = vector.extract_strided_slice %241 {offsets = [32, 0], sizes = [16, 256], strides = [1, 1]} : vector<64x256xf32> to vector<16x256xf32>
    %271 = arith.mulf %270, %235 : vector<16x256xf32>
    %cst_60 = arith.constant dense<0.000000e+00> : vector<256xf32>
    %272 = vector.multi_reduction <add>, %271, %cst_60 [0] : vector<16x256xf32> to vector<256xf32>
    %273 = vector.shape_cast %272 : vector<256xf32> to vector<1x256xf32>
    %274 = arith.mulf %273, %242 : vector<1x256xf32>
    %275 = arith.mulf %269, %243 : vector<1x256xf32>
    %276 = arith.addf %274, %275 : vector<1x256xf32>
    %277 = vector.extract_strided_slice %238 {offsets = [48, 0], sizes = [16, 256], strides = [1, 1]} : vector<64x256xf32> to vector<16x256xf32>
    %278 = arith.mulf %277, %193 : vector<16x256xf32>
    %cst_61 = arith.constant dense<0.000000e+00> : vector<256xf32>
    %279 = vector.multi_reduction <add>, %278, %cst_61 [0] : vector<16x256xf32> to vector<256xf32>
    %280 = vector.shape_cast %279 : vector<256xf32> to vector<1x256xf32>
    %281 = vector.extract_strided_slice %241 {offsets = [48, 0], sizes = [16, 256], strides = [1, 1]} : vector<64x256xf32> to vector<16x256xf32>
    %282 = arith.mulf %281, %235 : vector<16x256xf32>
    %cst_62 = arith.constant dense<0.000000e+00> : vector<256xf32>
    %283 = vector.multi_reduction <add>, %282, %cst_62 [0] : vector<16x256xf32> to vector<256xf32>
    %284 = vector.shape_cast %283 : vector<256xf32> to vector<1x256xf32>
    %285 = arith.mulf %284, %242 : vector<1x256xf32>
    %286 = arith.mulf %280, %243 : vector<1x256xf32>
    %287 = arith.addf %285, %286 : vector<1x256xf32>
    %288 = tpu.concatenate %254, %265, %276, %287 in 0 : vector<1x256xf32>, vector<1x256xf32>, vector<1x256xf32>, vector<1x256xf32> -> vector<4x256xf32>
    %c1_63 = arith.constant 1 : index
    %c0_64 = arith.constant 0 : index
    %c0_65 = arith.constant 0 : index
    %289 = vector.load %arg3[%c1_63, %c0_64, %c0_65] : memref<2x4x256xf32, #tpu.memory_space<vmem>>, vector<1x4x256xf32>
    %290 = vector.shape_cast %289 : vector<1x4x256xf32> to vector<4x256xf32>
    %291 = vector.shape_cast %288 : vector<4x256xf32> to vector<1x4x256xf32>
    tpu.vector_store %arg3[%c1_63, %c0_64, %c0_65], %291 {strides = array<i32>} : memref<2x4x256xf32, #tpu.memory_space<vmem>>, vector<1x4x256xf32>,
    return
  }
  func.func @transform_0(%arg0: i32) -> (i32, i32, i32) {
    %c0_i32 = arith.constant 0 : i32
    %c0_i32_0 = arith.constant 0 : i32
    %c0_i32_1 = arith.constant 0 : i32
    return %arg0, %c0_i32, %c0_i32_0 : i32, i32, i32
  }
  func.func @transform_1(%arg0: i32) -> (i32, i32, i32) {
    %c0_i32 = arith.constant 0 : i32
    %c0_i32_0 = arith.constant 0 : i32
    %c0_i32_1 = arith.constant 0 : i32
    return %arg0, %c0_i32, %c0_i32_0 : i32, i32, i32
  }
  func.func @transform_2(%arg0: i32) -> (i32, i32, i32) {
    %c0_i32 = arith.constant 0 : i32
    %c0_i32_0 = arith.constant 0 : i32
    %c0_i32_1 = arith.constant 0 : i32
    return %arg0, %c0_i32, %c0_i32_0 : i32, i32, i32
  }
}

</mosaic_0001>

<llo_original>
// kernel: tpu_custom_call.1
$region0: #{tpu_custom_call.1}
  #allocation0 [shape = 'u32[]', space=smem, size = 0x4, offset = 0x4, fixed_abs, tag = 'smem constant byte address 0x4 - core index']
  #allocation1 [shape = 'u32[72,128]{1,0:T(1,128)}', space=vmem, size = 0x9000, scoped, tag = 'internal scratch']
  %s0 = inlined_call_operand.vmem [shape: f32[4,128,16], index: 0, kind: input, shape index: {}]
  %s1 = inlined_call_operand.vmem [shape: f32[4,6,256], index: 1, kind: input, shape index: {}]
  %s2 = inlined_call_operand.hbm [shape: f32[4,4,256], index: 2, kind: output, shape index: {}]
  %s3 = sld [smem:[#allocation0]]
  $region41: #{tpu_custom_call.1} parent=0
    _
  %s5 = ssub.s32 1, %s3
  %s6 = scalar_select 0, %s5, %s3
  $region1: #{tpu_custom_call.1} parent=0
    #allocation2 [shape = 'u8[16384]{0}', space=vmem, size = 0x4000, scoped, tag = 'output window, operand 0']
    #allocation3 [shape = 's32[2]{0}', space=sflag, size = 0x8, scoped, tag = 'scoped memory for tpu_custom_call.1']
    %7 = vsyncpa [#allocation3], 0
    %s8 = scalar_lea.sflag [#allocation3], 1
    %9 = vsyncpa %s8, 0
    loop: start=0, step=1, limit=4
    $region2: #{tpu_custom_call.1} parent=1 // loop_pre_header
      _
    $region3: #{tpu_custom_call.1} parent=1 // loop_header
      %s11 = sphi 0, %s15
      %p12 = scmp.ge.s32.totalorder %s11, 4
      %s21 = sphi 0, %s23
      %s24 = sphi 0, %s21
      %s25 = sphi 0, %s24
      %s41 = sphi 0, %s25
      %s47 = sphi 0, %s49
      %s50 = sphi 0, %s47
      %s51 = sphi 0, %s50
      %s67 = sphi 0, %s51
      %s73 = sphi 0, %s75
      %s76 = sphi 0, %s73
      %s77 = sphi 0, %s76
      %s93 = sphi 0, %s77
    $region4: #{tpu_custom_call.1} parent=1 // loop_header_branch
      %14 = sbr.rel (%p12) target = $region8
    $region5: #{tpu_custom_call.1} parent=1 // loop_body
      %s16 = ssub.s32 %s11, 1
      %s17 = ssub.s32 %s11, 2
      %s18 = sadd.s32 %s11, 1
      %s19 = ssub.s32 %s11, %s18
      %p20 = scmp.eq.s32.totalorder %s19, 0
      %s22 = sadd.s32 %s21, 1
      %s23 = scalar_select %p20, %s21, %s22
      %p26 = pneg %p20
      %p27 = scmp.eq.s32.totalorder %s11, 1
      %p28 = por %p26, %p27
      %p29 = scmp.ne.s32.totalorder %s21, %s24
      %p30 = scmp.eq.s32.totalorder %s11, 0
      %p31 = por %p29, %p30
      %p32 = scmp.ne.s32.totalorder %s21, %s24
      %p33 = scmp.eq.s32.totalorder %s16, 1
      %p34 = por %p32, %p33
      %p35 = scmp.ne.s32.totalorder %s24, %s25
      %p36 = scmp.eq.s32.totalorder %s16, 0
      %p37 = por %p35, %p36
      %p38 = scmp.ne.s32.totalorder %s24, %s25
      %p39 = scmp.eq.s32.totalorder %s17, 1
      %p40 = por %p38, %p39
      %p42 = scmp.ne.s32.totalorder %s25, %s41
      %p43 = scmp.eq.s32.totalorder %s17, 0
      %p44 = por %p42, %p43
      %s45 = ssub.s32 %s11, %s18
      %p46 = scmp.eq.s32.totalorder %s45, 0
      %s48 = sadd.s32 %s47, 1
      %s49 = scalar_select %p46, %s47, %s48
      %p52 = pneg %p46
      %p53 = scmp.eq.s32.totalorder %s11, 1
      %p54 = por %p52, %p53
      %p55 = scmp.ne.s32.totalorder %s47, %s50
      %p56 = scmp.eq.s32.totalorder %s11, 0
      %p57 = por %p55, %p56
      %p58 = scmp.ne.s32.totalorder %s47, %s50
      %p59 = scmp.eq.s32.totalorder %s16, 1
      %p60 = por %p58, %p59
      %p61 = scmp.ne.s32.totalorder %s50, %s51
      %p62 = scmp.eq.s32.totalorder %s16, 0
      %p63 = por %p61, %p62
      %p64 = scmp.ne.s32.totalorder %s50, %s51
      %p65 = scmp.eq.s32.totalorder %s17, 1
      %p66 = por %p64, %p65
      %p68 = scmp.ne.s32.totalorder %s51, %s67
      %p69 = scmp.eq.s32.totalorder %s17, 0
      %p70 = por %p68, %p69
      %s71 = ssub.s32 %s11, %s18
      %p72 = scmp.eq.s32.totalorder %s71, 0
      %s74 = sadd.s32 %s73, 1
      %s75 = scalar_select %p72, %s73, %s74
      %p78 = pneg %p72
      %p79 = scmp.eq.s32.totalorder %s11, 1
      %p80 = por %p78, %p79
      %p81 = scmp.ne.s32.totalorder %s73, %s76
      %p82 = scmp.eq.s32.totalorder %s11, 0
      %p83 = por %p81, %p82
      %p84 = scmp.ne.s32.totalorder %s73, %s76
      %p85 = scmp.eq.s32.totalorder %s16, 1
      %p86 = por %p84, %p85
      %p87 = scmp.ne.s32.totalorder %s76, %s77
      %p88 = scmp.eq.s32.totalorder %s16, 0
      %p89 = por %p87, %p88
      %p90 = scmp.ne.s32.totalorder %s76, %s77
      %p91 = scmp.eq.s32.totalorder %s17, 1
      %p92 = por %p90, %p91
      %p94 = scmp.ne.s32.totalorder %s77, %s93
      %p95 = scmp.eq.s32.totalorder %s17, 0
      %p96 = por %p94, %p95
      %p97 = scmp.le.s32.totalorder 1, %s11
      %p98 = scmp.lt.s32.totalorder %s11, 3
      %p99 = pnand %p97, %p98
      %p100 = pneg %p99
      // Predicated region
      $region9: #{tpu_custom_call.1} parent=5 // pred_check
        _
      $region10: #{tpu_custom_call.1} parent=5 // pred_check_branch
        %102 = sbr.rel (%p99) target = $region12
      $region11: #{tpu_custom_call.1} parent=5 // pred_region
        %s103 = ssub.s32 %s11, 1
      $region12: #{tpu_custom_call.1} parent=5 // pred_fallthru
        _
      %p104 = scmp.lt.s32.totalorder %s11, 2
      // Predicated region
      $region13: #{tpu_custom_call.1} parent=5 // pred_check
        %p105 = pneg %p104
      $region14: #{tpu_custom_call.1} parent=5 // pred_check_branch
        %107 = sbr.rel (%p105) target = $region16
      $region15: #{tpu_custom_call.1} parent=5 // pred_region
        // Predicated region
        $region17: #{tpu_custom_call.1} parent=15 // pred_check
          %p108 = pneg %p31
        $region18: #{tpu_custom_call.1} parent=15 // pred_check_branch
          %110 = sbr.rel (%p108) target = $region20
        $region19: #{tpu_custom_call.1} parent=15 // pred_region
          %s111 = smul.u32 2, %s11
          %p112 = scmp.lt.s32.totalorder %s111, 3
          %s113 = scalar_select %p112, %s111, 3
          %s114 = smul.addr %s113, 16
          %s115 = smul.addr %s114, 8
          %s116 = scalar_lea.vmem %s0, %s115
          %s117 = smul.u32 2, %s11
        $region20: #{tpu_custom_call.1} parent=15 // pred_fallthru
          _
        // Predicated region
        $region21: #{tpu_custom_call.1} parent=15 // pred_check
          %p118 = pneg %p57
        $region22: #{tpu_custom_call.1} parent=15 // pred_check_branch
          %120 = sbr.rel (%p118) target = $region24
        $region23: #{tpu_custom_call.1} parent=15 // pred_region
          %s121 = smul.u32 2, %s11
          %p122 = scmp.lt.s32.totalorder %s121, 3
          %s123 = scalar_select %p122, %s121, 3
          %s124 = smul.addr %s123, 2
          %s125 = smul.addr %s124, 8
          %s126 = scalar_lea.vmem %s1, %s125
          %s127 = smul.u32 2, %s11
        $region24: #{tpu_custom_call.1} parent=15 // pred_fallthru
          _
      $region16: #{tpu_custom_call.1} parent=5 // pred_fallthru
        _
      %p128 = scmp.le.s32.totalorder 1, %s11
      %p129 = scmp.lt.s32.totalorder %s11, 3
      %p130 = pnand %p128, %p129
      %p131 = pneg %p130
      // Predicated region
      $region25: #{tpu_custom_call.1} parent=5 // pred_check
        _
      $region26: #{tpu_custom_call.1} parent=5 // pred_check_branch
        %133 = sbr.rel (%p130) target = $region28
      $region27: #{tpu_custom_call.1} parent=5 // pred_region
        %s134 = ssub.s32 %s11, 1
        %s135 = smul.u32 2, %s16
        %p136 = scmp.lt.s32.totalorder %s135, 3
        %s137 = scalar_select %p136, %s135, 3
        %s138 = smul.addr %s137, 16
        %s139 = smul.addr %s138, 8
        %s140 = scalar_lea.vmem %s0, %s139
        %p141 = pneg %p37
        %p142 = pneg %p34
        %s143 = smul.u32 2, %s16
        %p144 = scmp.lt.s32.totalorder %s143, 3
        %s145 = scalar_select %p144, %s143, 3
        %s146 = smul.addr %s145, 2
        %s147 = smul.addr %s146, 8
        %s148 = scalar_lea.vmem %s1, %s147
        %p149 = pneg %p63
        %p150 = pneg %p60
        %p151 = pneg %p89
        %p152 = pneg %p86
        %s153 = sand.u32 %s76, 1
        %s154 = scalar_lea.sflag [#allocation3], %s153
        %s155 = sand.u32 %s76, 1
        %s156 = smul.addr %s155, 16
        %s157 = scalar_lea.vmem [#allocation2], %s156
        %s158 = smul.u32 2, %s16
        %p159 = scmp.lt.s32.totalorder %s158, 3
        %s160 = scalar_select %p159, %s158, 3
        %s161 = smul.addr %s160, 16
        %s162 = smul.addr %s161, 8
        %s163 = scalar_lea.vmem %s0, %s162
        %s164 = smul.u32 2, %s16
        %s165 = smul.u32 2, %s16
        %p166 = scmp.lt.s32.totalorder %s165, 3
        %s167 = scalar_select %p166, %s165, 3
        %s168 = smul.addr %s167, 2
        %s169 = smul.addr %s168, 8
        %s170 = scalar_lea.vmem %s1, %s169
        %s171 = smul.u32 2, %s16
        %s172 = smul.u32 2, %s16
        %v174 = vlaneseq
        %v175 = vshrl.u32 %v174, 7
        %v176 = vadd.s32 %v175, 8
        %v177 = vld [vmem:[%s170] sm:$0x3f]
        %v178 = vld [vmem:[%s170 + $0x8] sm:$0x3f]
        %v179 = vld [vmem:[%s163] sm:$0xff]
        %v180 = vld [vmem:[%s163 + $0x8] sm:$0xff]
        %v181 = vld [vmem:[%s163 + $0x10] sm:$0xff]
        %v182 = vld [vmem:[%s163 + $0x18] sm:$0xff]
        %v183 = vld [vmem:[%s163 + $0x20] sm:$0xff]
        %v184 = vld [vmem:[%s163 + $0x28] sm:$0xff]
        %v185 = vld [vmem:[%s163 + $0x30] sm:$0xff]
        %v186 = vld [vmem:[%s163 + $0x38] sm:$0xff]
        %v187 = vld [vmem:[%s163 + $0x40] sm:$0xff]
        %v188 = vld [vmem:[%s163 + $0x48] sm:$0xff]
        %v189 = vld [vmem:[%s163 + $0x50] sm:$0xff]
        %v190 = vld [vmem:[%s163 + $0x58] sm:$0xff]
        %v191 = vld [vmem:[%s163 + $0x60] sm:$0xff]
        %v192 = vld [vmem:[%s163 + $0x68] sm:$0xff]
        %v193 = vld [vmem:[%s163 + $0x70] sm:$0xff]
        %v194 = vld [vmem:[%s163 + $0x78] sm:$0xff]
        %v195 = vpack.c.bf16 %v179, %v179
        %v196 = vpack.c.bf16 %v180, %v180
        %v197 = vpack.c.bf16 %v181, %v181
        %v198 = vpack.c.bf16 %v182, %v182
        %v199 = vpack.c.bf16 %v183, %v183
        %v200 = vpack.c.bf16 %v184, %v184
        %v201 = vpack.c.bf16 %v185, %v185
        %v202 = vpack.c.bf16 %v186, %v186
        %v203 = vpack.c.bf16 %v187, %v187
        %v204 = vpack.c.bf16 %v188, %v188
        %v205 = vpack.c.bf16 %v189, %v189
        %v206 = vpack.c.bf16 %v190, %v190
        %v207 = vpack.c.bf16 %v191, %v191
        %v208 = vpack.c.bf16 %v192, %v192
        %v209 = vpack.c.bf16 %v193, %v193
        %v210 = vpack.c.bf16 %v194, %v194
        %v211 = vfloor.f32 %v177
        %v212 = vfloor.f32 %v178
        %v213 = vsub.f32 %v177, %v211
        %v214 = vsub.f32 %v178, %v212
        %v215 = vcvt.f32.s32.to.zero.pseudo %v211
        %v216 = vcvt.f32.s32.to.zero.pseudo %v212
        %v217 = vperm.slane %v215, 0
        %v218 = vperm.slane %v216, 0
        %vm219 = vcmp.eq.s32.totalorder %v175, %v217
        %vm220 = vcmp.eq.s32.totalorder %v175, %v218
        %vm221 = vcmp.eq.s32.totalorder %v176, %v217
        %vm222 = vcmp.eq.s32.totalorder %v176, %v218
        %v223 = vsub.f32 1.0, %v213
        %v224 = vsub.f32 1.0, %v214
        %v225 = vperm.slane %v223, 0
        %v226 = vperm.slane %v224, 0
        %v227 = vsel %vm219, %v225, 0.0
        %v228 = vsel %vm220, %v226, 0.0
        %v229 = vsel %vm221, %v225, 0.0
        %v230 = vsel %vm222, %v226, 0.0
        %v231 = vadd.s32 %v215, 1
        %v232 = vadd.s32 %v216, 1
        %v233 = vperm.slane %v231, 0
        %v234 = vperm.slane %v232, 0
        %vm235 = vcmp.eq.s32.totalorder %v175, %v233
        %vm236 = vcmp.eq.s32.totalorder %v175, %v234
        %vm237 = vcmp.eq.s32.totalorder %v176, %v233
        %vm238 = vcmp.eq.s32.totalorder %v176, %v234
        %v239 = vperm.slane %v213, 0
        %v240 = vperm.slane %v214, 0
        %v241 = vsel %vm235, %v239, 0.0
        %v242 = vsel %vm236, %v240, 0.0
        %v243 = vsel %vm237, %v239, 0.0
        %v244 = vsel %vm238, %v240, 0.0
        %v245 = vadd.f32 %v227, %v241
        %v246 = vadd.f32 %v228, %v242
        %v247 = vadd.f32 %v229, %v243
        %v248 = vadd.f32 %v230, %v244
        %v249 = vperm.slane %v215, 1
        %v250 = vperm.slane %v216, 1
        %vm251 = vcmp.eq.s32.totalorder %v175, %v249
        %vm252 = vcmp.eq.s32.totalorder %v175, %v250
        %vm253 = vcmp.eq.s32.totalorder %v176, %v249
        %vm254 = vcmp.eq.s32.totalorder %v176, %v250
        %v255 = vperm.slane %v223, 1
        %v256 = vperm.slane %v224, 1
        %v257 = vsel %vm251, %v255, 0.0
        %v258 = vsel %vm252, %v256, 0.0
        %v259 = vsel %vm253, %v255, 0.0
        %v260 = vsel %vm254, %v256, 0.0
        %v261 = vperm.slane %v231, 1
        %v262 = vperm.slane %v232, 1
        %vm263 = vcmp.eq.s32.totalorder %v175, %v261
        %vm264 = vcmp.eq.s32.totalorder %v175, %v262
        %vm265 = vcmp.eq.s32.totalorder %v176, %v261
        %vm266 = vcmp.eq.s32.totalorder %v176, %v262
        %v267 = vperm.slane %v213, 1
        %v268 = vperm.slane %v214, 1
        %v269 = vsel %vm263, %v267, 0.0
        %v270 = vsel %vm264, %v268, 0.0
        %v271 = vsel %vm265, %v267, 0.0
        %v272 = vsel %vm266, %v268, 0.0
        %v273 = vadd.f32 %v257, %v269
        %v274 = vadd.f32 %v258, %v270
        %v275 = vadd.f32 %v259, %v271
        %v276 = vadd.f32 %v260, %v272
        %v277 = vperm.slane %v215, 2
        %v278 = vperm.slane %v216, 2
        %vm279 = vcmp.eq.s32.totalorder %v175, %v277
        %vm280 = vcmp.eq.s32.totalorder %v175, %v278
        %vm281 = vcmp.eq.s32.totalorder %v176, %v277
        %vm282 = vcmp.eq.s32.totalorder %v176, %v278
        %v283 = vperm.slane %v223, 2
        %v284 = vperm.slane %v224, 2
        %v285 = vsel %vm279, %v283, 0.0
        %v286 = vsel %vm280, %v284, 0.0
        %v287 = vsel %vm281, %v283, 0.0
        %v288 = vsel %vm282, %v284, 0.0
        %v289 = vperm.slane %v231, 2
        %v290 = vperm.slane %v232, 2
        %vm291 = vcmp.eq.s32.totalorder %v175, %v289
        %vm292 = vcmp.eq.s32.totalorder %v175, %v290
        %vm293 = vcmp.eq.s32.totalorder %v176, %v289
        %vm294 = vcmp.eq.s32.totalorder %v176, %v290
        %v295 = vperm.slane %v213, 2
        %v296 = vperm.slane %v214, 2
        %v297 = vsel %vm291, %v295, 0.0
        %v298 = vsel %vm292, %v296, 0.0
        %v299 = vsel %vm293, %v295, 0.0
        %v300 = vsel %vm294, %v296, 0.0
        %v301 = vadd.f32 %v285, %v297
        %v302 = vadd.f32 %v286, %v298
        %v303 = vadd.f32 %v287, %v299
        %v304 = vadd.f32 %v288, %v300
        %v305 = vperm.slane %v215, 3
        %v306 = vperm.slane %v216, 3
        %vm307 = vcmp.eq.s32.totalorder %v175, %v305
        %vm308 = vcmp.eq.s32.totalorder %v175, %v306
        %vm309 = vcmp.eq.s32.totalorder %v176, %v305
        %vm310 = vcmp.eq.s32.totalorder %v176, %v306
        %v311 = vperm.slane %v223, 3
        %v312 = vperm.slane %v224, 3
        %v313 = vsel %vm307, %v311, 0.0
        %v314 = vsel %vm308, %v312, 0.0
        %v315 = vsel %vm309, %v311, 0.0
        %v316 = vsel %vm310, %v312, 0.0
        %v317 = vperm.slane %v231, 3
        %v318 = vperm.slane %v232, 3
        %vm319 = vcmp.eq.s32.totalorder %v175, %v317
        %vm320 = vcmp.eq.s32.totalorder %v175, %v318
        %vm321 = vcmp.eq.s32.totalorder %v176, %v317
        %vm322 = vcmp.eq.s32.totalorder %v176, %v318
        %v323 = vperm.slane %v213, 3
        %v324 = vperm.slane %v214, 3
        %v325 = vsel %vm319, %v323, 0.0
        %v326 = vsel %vm320, %v324, 0.0
        %v327 = vsel %vm321, %v323, 0.0
        %v328 = vsel %vm322, %v324, 0.0
        %v329 = vadd.f32 %v313, %v325
        %v330 = vadd.f32 %v314, %v326
        %v331 = vadd.f32 %v315, %v327
        %v332 = vadd.f32 %v316, %v328
        %v333 = vpack.c.bf16 %v247, %v245
        %v334 = vpack.c.bf16 %v248, %v246
        %v343 = vunpack.c.l.b16 %v195
        %v344 = vunpack.c.l.b16 %v196
        %v345 = vunpack.c.l.b16 %v197
        %v346 = vunpack.c.l.b16 %v198
        %v347 = vunpack.c.l.b16 %v199
        %v348 = vunpack.c.l.b16 %v200
        %v349 = vunpack.c.l.b16 %v201
        %v350 = vunpack.c.l.b16 %v202
        %v351 = vpack.c.b16 %v344, %v343
        %v352 = vpack.c.b16 %v346, %v345
        %v353 = vpack.c.b16 %v348, %v347
        %v354 = vpack.c.b16 %v350, %v349
        %vm355 = vcmask 130048
        %v357 = vsel %vm355, %v351, 0
        %v360 = vsel %vm355, %v352, 0
        %v363 = vsel %vm355, %v353, 0
        %v366 = vsel %vm355, %v354, 0
        %368 = vmatpush.bf16.msra.mxu0 0
        %369 = vmatpush.bf16.msra.mxu0 0
        %370 = vmatpush.bf16.msra.mxu0 0
        %371 = vmatpush.bf16.msra.mxu0 0
        %372 = vmatpush.bf16.msra.mxu0 0
        %373 = vmatpush.bf16.msra.mxu0 0
        %374 = vmatpush.bf16.msra.mxu0 0
        %375 = vmatpush.bf16.msra.mxu0 %v333
        %376 = vmatmul.bf16.gmra.mxu0 %v357
        %v377 = vpop.f32.mrf.mxu0
        %v378 = vadd.f32 0.0, %v377
        %v379 = vpop.f32.mrf.mxu0
        %v380 = vadd.f32 0.0, %v379
        %381 = vmatmul.bf16.gmra.mxu0 %v360
        %v382 = vpop.f32.mrf.mxu0
        %v383 = vadd.f32 0.0, %v382
        %v384 = vpop.f32.mrf.mxu0
        %v385 = vadd.f32 0.0, %v384
        %386 = vmatmul.bf16.gmra.mxu0 %v363
        %v387 = vpop.f32.mrf.mxu0
        %v388 = vadd.f32 0.0, %v387
        %v389 = vpop.f32.mrf.mxu0
        %v390 = vadd.f32 0.0, %v389
        %391 = vmatmul.bf16.gmra.mxu0 %v366
        %v392 = vpop.f32.mrf.mxu0
        %v393 = vadd.f32 0.0, %v392
        %v394 = vpop.f32.mrf.mxu0
        %v395 = vadd.f32 0.0, %v394
        %396 = vdwg.mxu0
        %397 = vmatpush.bf16.msra.mxu0 0
        %398 = vmatpush.bf16.msra.mxu0 0
        %399 = vmatpush.bf16.msra.mxu0 0
        %400 = vmatpush.bf16.msra.mxu0 0
        %401 = vmatpush.bf16.msra.mxu0 0
        %402 = vmatpush.bf16.msra.mxu0 0
        %403 = vmatpush.bf16.msra.mxu0 0
        %404 = vmatpush.bf16.msra.mxu0 %v334
        %405 = vmatmul.bf16.gmra.mxu0 %v357
        %v406 = vpop.f32.mrf.mxu0
        %v407 = vadd.f32 0.0, %v406
        %v408 = vpop.f32.mrf.mxu0
        %v409 = vadd.f32 0.0, %v408
        %410 = vmatmul.bf16.gmra.mxu0 %v360
        %v411 = vpop.f32.mrf.mxu0
        %v412 = vadd.f32 0.0, %v411
        %v413 = vpop.f32.mrf.mxu0
        %v414 = vadd.f32 0.0, %v413
        %415 = vmatmul.bf16.gmra.mxu0 %v363
        %v416 = vpop.f32.mrf.mxu0
        %v417 = vadd.f32 0.0, %v416
        %v418 = vpop.f32.mrf.mxu0
        %v419 = vadd.f32 0.0, %v418
        %420 = vmatmul.bf16.gmra.mxu0 %v366
        %v421 = vpop.f32.mrf.mxu0
        %v422 = vadd.f32 0.0, %v421
        %v423 = vpop.f32.mrf.mxu0
        %v424 = vadd.f32 0.0, %v423
        %425 = vdwg.mxu0
        %v426 = vpack.c.bf16 %v303, %v301
        %v427 = vpack.c.bf16 %v304, %v302
        %v436 = vunpack.c.l.b16 %v203
        %v437 = vunpack.c.l.b16 %v204
        %v438 = vunpack.c.l.b16 %v205
        %v439 = vunpack.c.l.b16 %v206
        %v440 = vunpack.c.l.b16 %v207
        %v441 = vunpack.c.l.b16 %v208
        %v442 = vunpack.c.l.b16 %v209
        %v443 = vunpack.c.l.b16 %v210
        %v444 = vpack.c.b16 %v437, %v436
        %v445 = vpack.c.b16 %v439, %v438
        %v446 = vpack.c.b16 %v441, %v440
        %v447 = vpack.c.b16 %v443, %v442
        %v449 = vsel %vm355, %v444, 0
        %v452 = vsel %vm355, %v445, 0
        %v455 = vsel %vm355, %v446, 0
        %v458 = vsel %vm355, %v447, 0
        %460 = vmatpush.bf16.msra.mxu0 0
        %461 = vmatpush.bf16.msra.mxu0 0
        %462 = vmatpush.bf16.msra.mxu0 0
        %463 = vmatpush.bf16.msra.mxu0 0
        %464 = vmatpush.bf16.msra.mxu0 0
        %465 = vmatpush.bf16.msra.mxu0 0
        %466 = vmatpush.bf16.msra.mxu0 0
        %467 = vmatpush.bf16.msra.mxu0 %v426
        %468 = vmatmul.bf16.gmra.mxu0 %v449
        %v469 = vpop.f32.mrf.mxu0
        %v470 = vadd.f32 0.0, %v469
        %v471 = vpop.f32.mrf.mxu0
        %v472 = vadd.f32 0.0, %v471
        %473 = vmatmul.bf16.gmra.mxu0 %v452
        %v474 = vpop.f32.mrf.mxu0
        %v475 = vadd.f32 0.0, %v474
        %v476 = vpop.f32.mrf.mxu0
        %v477 = vadd.f32 0.0, %v476
        %478 = vmatmul.bf16.gmra.mxu0 %v455
        %v479 = vpop.f32.mrf.mxu0
        %v480 = vadd.f32 0.0, %v479
        %v481 = vpop.f32.mrf.mxu0
        %v482 = vadd.f32 0.0, %v481
        %483 = vmatmul.bf16.gmra.mxu0 %v458
        %v484 = vpop.f32.mrf.mxu0
        %v485 = vadd.f32 0.0, %v484
        %v486 = vpop.f32.mrf.mxu0
        %v487 = vadd.f32 0.0, %v486
        %488 = vdwg.mxu0
        %489 = vmatpush.bf16.msra.mxu0 0
        %490 = vmatpush.bf16.msra.mxu0 0
        %491 = vmatpush.bf16.msra.mxu0 0
        %492 = vmatpush.bf16.msra.mxu0 0
        %493 = vmatpush.bf16.msra.mxu0 0
        %494 = vmatpush.bf16.msra.mxu0 0
        %495 = vmatpush.bf16.msra.mxu0 0
        %496 = vmatpush.bf16.msra.mxu0 %v427
        %497 = vmatmul.bf16.gmra.mxu0 %v449
        %v498 = vpop.f32.mrf.mxu0
        %v499 = vadd.f32 0.0, %v498
        %v500 = vpop.f32.mrf.mxu0
        %v501 = vadd.f32 0.0, %v500
        %502 = vmatmul.bf16.gmra.mxu0 %v452
        %v503 = vpop.f32.mrf.mxu0
        %v504 = vadd.f32 0.0, %v503
        %v505 = vpop.f32.mrf.mxu0
        %v506 = vadd.f32 0.0, %v505
        %507 = vmatmul.bf16.gmra.mxu0 %v455
        %v508 = vpop.f32.mrf.mxu0
        %v509 = vadd.f32 0.0, %v508
        %v510 = vpop.f32.mrf.mxu0
        %v511 = vadd.f32 0.0, %v510
        %512 = vmatmul.bf16.gmra.mxu0 %v458
        %v513 = vpop.f32.mrf.mxu0
        %v514 = vadd.f32 0.0, %v513
        %v515 = vpop.f32.mrf.mxu0
        %v516 = vadd.f32 0.0, %v515
        %517 = vdwg.mxu0
        %v518 = vmul.f32 %v378, %v273
        %v519 = vmul.f32 %v407, %v274
        %v520 = vmul.f32 %v380, %v275
        %v521 = vmul.f32 %v409, %v276
        %v522 = vadd.f32 %v518, %v520
        %v523 = vrot.slane %v522, 4
        %v524 = vadd.f32 %v522, %v523
        %v525 = vrot.slane %v524, 2
        %v526 = vadd.f32 %v524, %v525
        %v527 = vrot.slane %v526, 1
        %v528 = vadd.f32 %v526, %v527
        %v529 = vadd.f32 %v519, %v521
        %v530 = vrot.slane %v529, 4
        %v531 = vadd.f32 %v529, %v530
        %v532 = vrot.slane %v531, 2
        %v533 = vadd.f32 %v531, %v532
        %v534 = vrot.slane %v533, 1
        %v535 = vadd.f32 %v533, %v534
        %v536 = vmul.f32 %v470, %v329
        %v537 = vmul.f32 %v499, %v330
        %v538 = vmul.f32 %v472, %v331
        %v539 = vmul.f32 %v501, %v332
        %v540 = vadd.f32 %v536, %v538
        %v541 = vrot.slane %v540, 4
        %v542 = vadd.f32 %v540, %v541
        %v543 = vrot.slane %v542, 2
        %v544 = vadd.f32 %v542, %v543
        %v545 = vrot.slane %v544, 1
        %v546 = vadd.f32 %v544, %v545
        %v547 = vadd.f32 %v537, %v539
        %v548 = vrot.slane %v547, 4
        %v549 = vadd.f32 %v547, %v548
        %v550 = vrot.slane %v549, 2
        %v551 = vadd.f32 %v549, %v550
        %v552 = vrot.slane %v551, 1
        %v553 = vadd.f32 %v551, %v552
        %v554 = vmul.f32 %v546, %v177
        %v555 = vmul.f32 %v553, %v178
        %v556 = vmul.f32 %v528, %v177
        %v557 = vmul.f32 %v535, %v178
        %v560 = vrot.slane %v556, 1
        %v561 = vrot.slane %v557, 1
        %v564 = vadd.f32 %v554, %v560
        %v565 = vadd.f32 %v555, %v561
        %v566 = vmul.f32 %v383, %v273
        %v567 = vmul.f32 %v412, %v274
        %v568 = vmul.f32 %v385, %v275
        %v569 = vmul.f32 %v414, %v276
        %v570 = vadd.f32 %v566, %v568
        %v571 = vrot.slane %v570, 4
        %v572 = vadd.f32 %v570, %v571
        %v573 = vrot.slane %v572, 2
        %v574 = vadd.f32 %v572, %v573
        %v575 = vrot.slane %v574, 1
        %v576 = vadd.f32 %v574, %v575
        %v577 = vadd.f32 %v567, %v569
        %v578 = vrot.slane %v577, 4
        %v579 = vadd.f32 %v577, %v578
        %v580 = vrot.slane %v579, 2
        %v581 = vadd.f32 %v579, %v580
        %v582 = vrot.slane %v581, 1
        %v583 = vadd.f32 %v581, %v582
        %v584 = vmul.f32 %v475, %v329
        %v585 = vmul.f32 %v504, %v330
        %v586 = vmul.f32 %v477, %v331
        %v587 = vmul.f32 %v506, %v332
        %v588 = vadd.f32 %v584, %v586
        %v589 = vrot.slane %v588, 4
        %v590 = vadd.f32 %v588, %v589
        %v591 = vrot.slane %v590, 2
        %v592 = vadd.f32 %v590, %v591
        %v593 = vrot.slane %v592, 1
        %v594 = vadd.f32 %v592, %v593
        %v595 = vadd.f32 %v585, %v587
        %v596 = vrot.slane %v595, 4
        %v597 = vadd.f32 %v595, %v596
        %v598 = vrot.slane %v597, 2
        %v599 = vadd.f32 %v597, %v598
        %v600 = vrot.slane %v599, 1
        %v601 = vadd.f32 %v599, %v600
        %v602 = vmul.f32 %v594, %v177
        %v603 = vmul.f32 %v601, %v178
        %v604 = vmul.f32 %v576, %v177
        %v605 = vmul.f32 %v583, %v178
        %v608 = vrot.slane %v604, 1
        %v609 = vrot.slane %v605, 1
        %v612 = vadd.f32 %v602, %v608
        %v613 = vadd.f32 %v603, %v609
        %v614 = vmul.f32 %v388, %v273
        %v615 = vmul.f32 %v417, %v274
        %v616 = vmul.f32 %v390, %v275
        %v617 = vmul.f32 %v419, %v276
        %v618 = vadd.f32 %v614, %v616
        %v619 = vrot.slane %v618, 4
        %v620 = vadd.f32 %v618, %v619
        %v621 = vrot.slane %v620, 2
        %v622 = vadd.f32 %v620, %v621
        %v623 = vrot.slane %v622, 1
        %v624 = vadd.f32 %v622, %v623
        %v625 = vadd.f32 %v615, %v617
        %v626 = vrot.slane %v625, 4
        %v627 = vadd.f32 %v625, %v626
        %v628 = vrot.slane %v627, 2
        %v629 = vadd.f32 %v627, %v628
        %v630 = vrot.slane %v629, 1
        %v631 = vadd.f32 %v629, %v630
        %v632 = vmul.f32 %v480, %v329
        %v633 = vmul.f32 %v509, %v330
        %v634 = vmul.f32 %v482, %v331
        %v635 = vmul.f32 %v511, %v332
        %v636 = vadd.f32 %v632, %v634
        %v637 = vrot.slane %v636, 4
        %v638 = vadd.f32 %v636, %v637
        %v639 = vrot.slane %v638, 2
        %v640 = vadd.f32 %v638, %v639
        %v641 = vrot.slane %v640, 1
        %v642 = vadd.f32 %v640, %v641
        %v643 = vadd.f32 %v633, %v635
        %v644 = vrot.slane %v643, 4
        %v645 = vadd.f32 %v643, %v644
        %v646 = vrot.slane %v645, 2
        %v647 = vadd.f32 %v645, %v646
        %v648 = vrot.slane %v647, 1
        %v649 = vadd.f32 %v647, %v648
        %v650 = vmul.f32 %v642, %v177
        %v651 = vmul.f32 %v649, %v178
        %v652 = vmul.f32 %v624, %v177
        %v653 = vmul.f32 %v631, %v178
        %v656 = vrot.slane %v652, 1
        %v657 = vrot.slane %v653, 1
        %v660 = vadd.f32 %v650, %v656
        %v661 = vadd.f32 %v651, %v657
        %v662 = vmul.f32 %v393, %v273
        %v663 = vmul.f32 %v422, %v274
        %v664 = vmul.f32 %v395, %v275
        %v665 = vmul.f32 %v424, %v276
        %v666 = vadd.f32 %v662, %v664
        %v667 = vrot.slane %v666, 4
        %v668 = vadd.f32 %v666, %v667
        %v669 = vrot.slane %v668, 2
        %v670 = vadd.f32 %v668, %v669
        %v671 = vrot.slane %v670, 1
        %v672 = vadd.f32 %v670, %v671
        %v673 = vadd.f32 %v663, %v665
        %v674 = vrot.slane %v673, 4
        %v675 = vadd.f32 %v673, %v674
        %v676 = vrot.slane %v675, 2
        %v677 = vadd.f32 %v675, %v676
        %v678 = vrot.slane %v677, 1
        %v679 = vadd.f32 %v677, %v678
        %v680 = vmul.f32 %v485, %v329
        %v681 = vmul.f32 %v514, %v330
        %v682 = vmul.f32 %v487, %v331
        %v683 = vmul.f32 %v516, %v332
        %v684 = vadd.f32 %v680, %v682
        %v685 = vrot.slane %v684, 4
        %v686 = vadd.f32 %v684, %v685
        %v687 = vrot.slane %v686, 2
        %v688 = vadd.f32 %v686, %v687
        %v689 = vrot.slane %v688, 1
        %v690 = vadd.f32 %v688, %v689
        %v691 = vadd.f32 %v681, %v683
        %v692 = vrot.slane %v691, 4
        %v693 = vadd.f32 %v691, %v692
        %v694 = vrot.slane %v693, 2
        %v695 = vadd.f32 %v693, %v694
        %v696 = vrot.slane %v695, 1
        %v697 = vadd.f32 %v695, %v696
        %v698 = vmul.f32 %v690, %v177
        %v699 = vmul.f32 %v697, %v178
        %v700 = vmul.f32 %v672, %v177
        %v701 = vmul.f32 %v679, %v178
        %v704 = vrot.slane %v700, 1
        %v705 = vrot.slane %v701, 1
        %v708 = vadd.f32 %v698, %v704
        %v709 = vadd.f32 %v699, %v705
        %v712 = vrot.slane %v564, 4
        %v713 = vrot.slane %v565, 4
        %v718 = vrot.slane %v612, 3
        %v719 = vrot.slane %v613, 3
        %v724 = vrot.slane %v660, 2
        %v725 = vrot.slane %v661, 2
        %v730 = vrot.slane %v708, 1
        %v731 = vrot.slane %v709, 1
        %vm734 = vcmask 1040384
        %v735 = vsel %vm734, %v712, %v718
        %v736 = vsel %vm734, %v713, %v719
        %vm737 = vcmask 1041408
        %v738 = vsel %vm737, %v735, %v724
        %v739 = vsel %vm737, %v736, %v725
        %vm740 = vcmask 1042432
        %v741 = vsel %vm740, %v738, %v730
        %v742 = vsel %vm740, %v739, %v731
        %v745 = vrot.slane %v742, 4
        %vm746 = vcmask 1043456
        %v747 = vsel %vm746, %v741, %v745
        %749 = vst [vmem:[%s157] sm:$0xff] %v747
        %s750 = scalar_lea.vmem %s170, 16
        %v751 = vld [vmem:[%s750] sm:$0x3f]
        %v752 = vld [vmem:[%s750 + $0x8] sm:$0x3f]
        %s753 = scalar_lea.vmem %s163, 128
        %v754 = vld [vmem:[%s753] sm:$0xff]
        %v755 = vld [vmem:[%s753 + $0x8] sm:$0xff]
        %v756 = vld [vmem:[%s753 + $0x10] sm:$0xff]
        %v757 = vld [vmem:[%s753 + $0x18] sm:$0xff]
        %v758 = vld [vmem:[%s753 + $0x20] sm:$0xff]
        %v759 = vld [vmem:[%s753 + $0x28] sm:$0xff]
        %v760 = vld [vmem:[%s753 + $0x30] sm:$0xff]
        %v761 = vld [vmem:[%s753 + $0x38] sm:$0xff]
        %v762 = vld [vmem:[%s753 + $0x40] sm:$0xff]
        %v763 = vld [vmem:[%s753 + $0x48] sm:$0xff]
        %v764 = vld [vmem:[%s753 + $0x50] sm:$0xff]
        %v765 = vld [vmem:[%s753 + $0x58] sm:$0xff]
        %v766 = vld [vmem:[%s753 + $0x60] sm:$0xff]
        %v767 = vld [vmem:[%s753 + $0x68] sm:$0xff]
        %v768 = vld [vmem:[%s753 + $0x70] sm:$0xff]
        %v769 = vld [vmem:[%s753 + $0x78] sm:$0xff]
        %v770 = vpack.c.bf16 %v754, %v754
        %v771 = vpack.c.bf16 %v755, %v755
        %v772 = vpack.c.bf16 %v756, %v756
        %v773 = vpack.c.bf16 %v757, %v757
        %v774 = vpack.c.bf16 %v758, %v758
        %v775 = vpack.c.bf16 %v759, %v759
        %v776 = vpack.c.bf16 %v760, %v760
        %v777 = vpack.c.bf16 %v761, %v761
        %v778 = vpack.c.bf16 %v762, %v762
        %v779 = vpack.c.bf16 %v763, %v763
        %v780 = vpack.c.bf16 %v764, %v764
        %v781 = vpack.c.bf16 %v765, %v765
        %v782 = vpack.c.bf16 %v766, %v766
        %v783 = vpack.c.bf16 %v767, %v767
        %v784 = vpack.c.bf16 %v768, %v768
        %v785 = vpack.c.bf16 %v769, %v769
        %v786 = vfloor.f32 %v751
        %v787 = vfloor.f32 %v752
        %v788 = vsub.f32 %v751, %v786
        %v789 = vsub.f32 %v752, %v787
        %v790 = vcvt.f32.s32.to.zero.pseudo %v786
        %v791 = vcvt.f32.s32.to.zero.pseudo %v787
        %v792 = vperm.slane %v790, 0
        %v793 = vperm.slane %v791, 0
        %vm794 = vcmp.eq.s32.totalorder %v175, %v792
        %vm795 = vcmp.eq.s32.totalorder %v175, %v793
        %vm796 = vcmp.eq.s32.totalorder %v176, %v792
        %vm797 = vcmp.eq.s32.totalorder %v176, %v793
        %v798 = vsub.f32 1.0, %v788
        %v799 = vsub.f32 1.0, %v789
        %v800 = vperm.slane %v798, 0
        %v801 = vperm.slane %v799, 0
        %v802 = vsel %vm794, %v800, 0.0
        %v803 = vsel %vm795, %v801, 0.0
        %v804 = vsel %vm796, %v800, 0.0
        %v805 = vsel %vm797, %v801, 0.0
        %v806 = vadd.s32 %v790, 1
        %v807 = vadd.s32 %v791, 1
        %v808 = vperm.slane %v806, 0
        %v809 = vperm.slane %v807, 0
        %vm810 = vcmp.eq.s32.totalorder %v175, %v808
        %vm811 = vcmp.eq.s32.totalorder %v175, %v809
        %vm812 = vcmp.eq.s32.totalorder %v176, %v808
        %vm813 = vcmp.eq.s32.totalorder %v176, %v809
        %v814 = vperm.slane %v788, 0
        %v815 = vperm.slane %v789, 0
        %v816 = vsel %vm810, %v814, 0.0
        %v817 = vsel %vm811, %v815, 0.0
        %v818 = vsel %vm812, %v814, 0.0
        %v819 = vsel %vm813, %v815, 0.0
        %v820 = vadd.f32 %v802, %v816
        %v821 = vadd.f32 %v803, %v817
        %v822 = vadd.f32 %v804, %v818
        %v823 = vadd.f32 %v805, %v819
        %v824 = vperm.slane %v790, 1
        %v825 = vperm.slane %v791, 1
        %vm826 = vcmp.eq.s32.totalorder %v175, %v824
        %vm827 = vcmp.eq.s32.totalorder %v175, %v825
        %vm828 = vcmp.eq.s32.totalorder %v176, %v824
        %vm829 = vcmp.eq.s32.totalorder %v176, %v825
        %v830 = vperm.slane %v798, 1
        %v831 = vperm.slane %v799, 1
        %v832 = vsel %vm826, %v830, 0.0
        %v833 = vsel %vm827, %v831, 0.0
        %v834 = vsel %vm828, %v830, 0.0
        %v835 = vsel %vm829, %v831, 0.0
        %v836 = vperm.slane %v806, 1
        %v837 = vperm.slane %v807, 1
        %vm838 = vcmp.eq.s32.totalorder %v175, %v836
        %vm839 = vcmp.eq.s32.totalorder %v175, %v837
        %vm840 = vcmp.eq.s32.totalorder %v176, %v836
        %vm841 = vcmp.eq.s32.totalorder %v176, %v837
        %v842 = vperm.slane %v788, 1
        %v843 = vperm.slane %v789, 1
        %v844 = vsel %vm838, %v842, 0.0
        %v845 = vsel %vm839, %v843, 0.0
        %v846 = vsel %vm840, %v842, 0.0
        %v847 = vsel %vm841, %v843, 0.0
        %v848 = vadd.f32 %v832, %v844
        %v849 = vadd.f32 %v833, %v845
        %v850 = vadd.f32 %v834, %v846
        %v851 = vadd.f32 %v835, %v847
        %v852 = vperm.slane %v790, 2
        %v853 = vperm.slane %v791, 2
        %vm854 = vcmp.eq.s32.totalorder %v175, %v852
        %vm855 = vcmp.eq.s32.totalorder %v175, %v853
        %vm856 = vcmp.eq.s32.totalorder %v176, %v852
        %vm857 = vcmp.eq.s32.totalorder %v176, %v853
        %v858 = vperm.slane %v798, 2
        %v859 = vperm.slane %v799, 2
        %v860 = vsel %vm854, %v858, 0.0
        %v861 = vsel %vm855, %v859, 0.0
        %v862 = vsel %vm856, %v858, 0.0
        %v863 = vsel %vm857, %v859, 0.0
        %v864 = vperm.slane %v806, 2
        %v865 = vperm.slane %v807, 2
        %vm866 = vcmp.eq.s32.totalorder %v175, %v864
        %vm867 = vcmp.eq.s32.totalorder %v175, %v865
        %vm868 = vcmp.eq.s32.totalorder %v176, %v864
        %vm869 = vcmp.eq.s32.totalorder %v176, %v865
        %v870 = vperm.slane %v788, 2
        %v871 = vperm.slane %v789, 2
        %v872 = vsel %vm866, %v870, 0.0
        %v873 = vsel %vm867, %v871, 0.0
        %v874 = vsel %vm868, %v870, 0.0
        %v875 = vsel %vm869, %v871, 0.0
        %v876 = vadd.f32 %v860, %v872
        %v877 = vadd.f32 %v861, %v873
        %v878 = vadd.f32 %v862, %v874
        %v879 = vadd.f32 %v863, %v875
        %v880 = vperm.slane %v790, 3
        %v881 = vperm.slane %v791, 3
        %vm882 = vcmp.eq.s32.totalorder %v175, %v880
        %vm883 = vcmp.eq.s32.totalorder %v175, %v881
        %vm884 = vcmp.eq.s32.totalorder %v176, %v880
        %vm885 = vcmp.eq.s32.totalorder %v176, %v881
        %v886 = vperm.slane %v798, 3
        %v887 = vperm.slane %v799, 3
        %v888 = vsel %vm882, %v886, 0.0
        %v889 = vsel %vm883, %v887, 0.0
        %v890 = vsel %vm884, %v886, 0.0
        %v891 = vsel %vm885, %v887, 0.0
        %v892 = vperm.slane %v806, 3
        %v893 = vperm.slane %v807, 3
        %vm894 = vcmp.eq.s32.totalorder %v175, %v892
        %vm895 = vcmp.eq.s32.totalorder %v175, %v893
        %vm896 = vcmp.eq.s32.totalorder %v176, %v892
        %vm897 = vcmp.eq.s32.totalorder %v176, %v893
        %v898 = vperm.slane %v788, 3
        %v899 = vperm.slane %v789, 3
        %v900 = vsel %vm894, %v898, 0.0
        %v901 = vsel %vm895, %v899, 0.0
        %v902 = vsel %vm896, %v898, 0.0
        %v903 = vsel %vm897, %v899, 0.0
        %v904 = vadd.f32 %v888, %v900
        %v905 = vadd.f32 %v889, %v901
        %v906 = vadd.f32 %v890, %v902
        %v907 = vadd.f32 %v891, %v903
        %v908 = vpack.c.bf16 %v822, %v820
        %v909 = vpack.c.bf16 %v823, %v821
        %v918 = vunpack.c.l.b16 %v770
        %v919 = vunpack.c.l.b16 %v771
        %v920 = vunpack.c.l.b16 %v772
        %v921 = vunpack.c.l.b16 %v773
        %v922 = vunpack.c.l.b16 %v774
        %v923 = vunpack.c.l.b16 %v775
        %v924 = vunpack.c.l.b16 %v776
        %v925 = vunpack.c.l.b16 %v777
        %v926 = vpack.c.b16 %v919, %v918
        %v927 = vpack.c.b16 %v921, %v920
        %v928 = vpack.c.b16 %v923, %v922
        %v929 = vpack.c.b16 %v925, %v924
        %v931 = vsel %vm355, %v926, 0
        %v934 = vsel %vm355, %v927, 0
        %v937 = vsel %vm355, %v928, 0
        %v940 = vsel %vm355, %v929, 0
        %942 = vmatpush.bf16.msra.mxu0 0
        %943 = vmatpush.bf16.msra.mxu0 0
        %944 = vmatpush.bf16.msra.mxu0 0
        %945 = vmatpush.bf16.msra.mxu0 0
        %946 = vmatpush.bf16.msra.mxu0 0
        %947 = vmatpush.bf16.msra.mxu0 0
        %948 = vmatpush.bf16.msra.mxu0 0
        %949 = vmatpush.bf16.msra.mxu0 %v908
        %950 = vmatmul.bf16.gmra.mxu0 %v931
        %v951 = vpop.f32.mrf.mxu0
        %v952 = vadd.f32 0.0, %v951
        %v953 = vpop.f32.mrf.mxu0
        %v954 = vadd.f32 0.0, %v953
        %955 = vmatmul.bf16.gmra.mxu0 %v934
        %v956 = vpop.f32.mrf.mxu0
        %v957 = vadd.f32 0.0, %v956
        %v958 = vpop.f32.mrf.mxu0
        %v959 = vadd.f32 0.0, %v958
        %960 = vmatmul.bf16.gmra.mxu0 %v937
        %v961 = vpop.f32.mrf.mxu0
        %v962 = vadd.f32 0.0, %v961
        %v963 = vpop.f32.mrf.mxu0
        %v964 = vadd.f32 0.0, %v963
        %965 = vmatmul.bf16.gmra.mxu0 %v940
        %v966 = vpop.f32.mrf.mxu0
        %v967 = vadd.f32 0.0, %v966
        %v968 = vpop.f32.mrf.mxu0
        %v969 = vadd.f32 0.0, %v968
        %970 = vdwg.mxu0
        %971 = vmatpush.bf16.msra.mxu0 0
        %972 = vmatpush.bf16.msra.mxu0 0
        %973 = vmatpush.bf16.msra.mxu0 0
        %974 = vmatpush.bf16.msra.mxu0 0
        %975 = vmatpush.bf16.msra.mxu0 0
        %976 = vmatpush.bf16.msra.mxu0 0
        %977 = vmatpush.bf16.msra.mxu0 0
        %978 = vmatpush.bf16.msra.mxu0 %v909
        %979 = vmatmul.bf16.gmra.mxu0 %v931
        %v980 = vpop.f32.mrf.mxu0
        %v981 = vadd.f32 0.0, %v980
        %v982 = vpop.f32.mrf.mxu0
        %v983 = vadd.f32 0.0, %v982
        %984 = vmatmul.bf16.gmra.mxu0 %v934
        %v985 = vpop.f32.mrf.mxu0
        %v986 = vadd.f32 0.0, %v985
        %v987 = vpop.f32.mrf.mxu0
        %v988 = vadd.f32 0.0, %v987
        %989 = vmatmul.bf16.gmra.mxu0 %v937
        %v990 = vpop.f32.mrf.mxu0
        %v991 = vadd.f32 0.0, %v990
        %v992 = vpop.f32.mrf.mxu0
        %v993 = vadd.f32 0.0, %v992
        %994 = vmatmul.bf16.gmra.mxu0 %v940
        %v995 = vpop.f32.mrf.mxu0
        %v996 = vadd.f32 0.0, %v995
        %v997 = vpop.f32.mrf.mxu0
        %v998 = vadd.f32 0.0, %v997
        %999 = vdwg.mxu0
        %v1000 = vpack.c.bf16 %v878, %v876
        %v1001 = vpack.c.bf16 %v879, %v877
        %v1010 = vunpack.c.l.b16 %v778
        %v1011 = vunpack.c.l.b16 %v779
        %v1012 = vunpack.c.l.b16 %v780
        %v1013 = vunpack.c.l.b16 %v781
        %v1014 = vunpack.c.l.b16 %v782
        %v1015 = vunpack.c.l.b16 %v783
        %v1016 = vunpack.c.l.b16 %v784
        %v1017 = vunpack.c.l.b16 %v785
        %v1018 = vpack.c.b16 %v1011, %v1010
        %v1019 = vpack.c.b16 %v1013, %v1012
        %v1020 = vpack.c.b16 %v1015, %v1014
        %v1021 = vpack.c.b16 %v1017, %v1016
        %v1023 = vsel %vm355, %v1018, 0
        %v1026 = vsel %vm355, %v1019, 0
        %v1029 = vsel %vm355, %v1020, 0
        %v1032 = vsel %vm355, %v1021, 0
        %1034 = vmatpush.bf16.msra.mxu0 0
        %1035 = vmatpush.bf16.msra.mxu0 0
        %1036 = vmatpush.bf16.msra.mxu0 0
        %1037 = vmatpush.bf16.msra.mxu0 0
        %1038 = vmatpush.bf16.msra.mxu0 0
        %1039 = vmatpush.bf16.msra.mxu0 0
        %1040 = vmatpush.bf16.msra.mxu0 0
        %1041 = vmatpush.bf16.msra.mxu0 %v1000
        %1042 = vmatmul.bf16.gmra.mxu0 %v1023
        %v1043 = vpop.f32.mrf.mxu0
        %v1044 = vadd.f32 0.0, %v1043
        %v1045 = vpop.f32.mrf.mxu0
        %v1046 = vadd.f32 0.0, %v1045
        %1047 = vmatmul.bf16.gmra.mxu0 %v1026
        %v1048 = vpop.f32.mrf.mxu0
        %v1049 = vadd.f32 0.0, %v1048
        %v1050 = vpop.f32.mrf.mxu0
        %v1051 = vadd.f32 0.0, %v1050
        %1052 = vmatmul.bf16.gmra.mxu0 %v1029
        %v1053 = vpop.f32.mrf.mxu0
        %v1054 = vadd.f32 0.0, %v1053
        %v1055 = vpop.f32.mrf.mxu0
        %v1056 = vadd.f32 0.0, %v1055
        %1057 = vmatmul.bf16.gmra.mxu0 %v1032
        %v1058 = vpop.f32.mrf.mxu0
        %v1059 = vadd.f32 0.0, %v1058
        %v1060 = vpop.f32.mrf.mxu0
        %v1061 = vadd.f32 0.0, %v1060
        %1062 = vdwg.mxu0
        %1063 = vmatpush.bf16.msra.mxu0 0
        %1064 = vmatpush.bf16.msra.mxu0 0
        %1065 = vmatpush.bf16.msra.mxu0 0
        %1066 = vmatpush.bf16.msra.mxu0 0
        %1067 = vmatpush.bf16.msra.mxu0 0
        %1068 = vmatpush.bf16.msra.mxu0 0
        %1069 = vmatpush.bf16.msra.mxu0 0
        %1070 = vmatpush.bf16.msra.mxu0 %v1001
        %1071 = vmatmul.bf16.gmra.mxu0 %v1023
        %v1072 = vpop.f32.mrf.mxu0
        %v1073 = vadd.f32 0.0, %v1072
        %v1074 = vpop.f32.mrf.mxu0
        %v1075 = vadd.f32 0.0, %v1074
        %1076 = vmatmul.bf16.gmra.mxu0 %v1026
        %v1077 = vpop.f32.mrf.mxu0
        %v1078 = vadd.f32 0.0, %v1077
        %v1079 = vpop.f32.mrf.mxu0
        %v1080 = vadd.f32 0.0, %v1079
        %1081 = vmatmul.bf16.gmra.mxu0 %v1029
        %v1082 = vpop.f32.mrf.mxu0
        %v1083 = vadd.f32 0.0, %v1082
        %v1084 = vpop.f32.mrf.mxu0
        %v1085 = vadd.f32 0.0, %v1084
        %1086 = vmatmul.bf16.gmra.mxu0 %v1032
        %v1087 = vpop.f32.mrf.mxu0
        %v1088 = vadd.f32 0.0, %v1087
        %v1089 = vpop.f32.mrf.mxu0
        %v1090 = vadd.f32 0.0, %v1089
        %1091 = vdwg.mxu0
        %v1092 = vmul.f32 %v952, %v848
        %v1093 = vmul.f32 %v981, %v849
        %v1094 = vmul.f32 %v954, %v850
        %v1095 = vmul.f32 %v983, %v851
        %v1096 = vadd.f32 %v1092, %v1094
        %v1097 = vrot.slane %v1096, 4
        %v1098 = vadd.f32 %v1096, %v1097
        %v1099 = vrot.slane %v1098, 2
        %v1100 = vadd.f32 %v1098, %v1099
        %v1101 = vrot.slane %v1100, 1
        %v1102 = vadd.f32 %v1100, %v1101
        %v1103 = vadd.f32 %v1093, %v1095
        %v1104 = vrot.slane %v1103, 4
        %v1105 = vadd.f32 %v1103, %v1104
        %v1106 = vrot.slane %v1105, 2
        %v1107 = vadd.f32 %v1105, %v1106
        %v1108 = vrot.slane %v1107, 1
        %v1109 = vadd.f32 %v1107, %v1108
        %v1110 = vmul.f32 %v1044, %v904
        %v1111 = vmul.f32 %v1073, %v905
        %v1112 = vmul.f32 %v1046, %v906
        %v1113 = vmul.f32 %v1075, %v907
        %v1114 = vadd.f32 %v1110, %v1112
        %v1115 = vrot.slane %v1114, 4
        %v1116 = vadd.f32 %v1114, %v1115
        %v1117 = vrot.slane %v1116, 2
        %v1118 = vadd.f32 %v1116, %v1117
        %v1119 = vrot.slane %v1118, 1
        %v1120 = vadd.f32 %v1118, %v1119
        %v1121 = vadd.f32 %v1111, %v1113
        %v1122 = vrot.slane %v1121, 4
        %v1123 = vadd.f32 %v1121, %v1122
        %v1124 = vrot.slane %v1123, 2
        %v1125 = vadd.f32 %v1123, %v1124
        %v1126 = vrot.slane %v1125, 1
        %v1127 = vadd.f32 %v1125, %v1126
        %v1128 = vmul.f32 %v1120, %v751
        %v1129 = vmul.f32 %v1127, %v752
        %v1130 = vmul.f32 %v1102, %v751
        %v1131 = vmul.f32 %v1109, %v752
        %v1134 = vrot.slane %v1130, 1
        %v1135 = vrot.slane %v1131, 1
        %v1138 = vadd.f32 %v1128, %v1134
        %v1139 = vadd.f32 %v1129, %v1135
        %v1140 = vmul.f32 %v957, %v848
        %v1141 = vmul.f32 %v986, %v849
        %v1142 = vmul.f32 %v959, %v850
        %v1143 = vmul.f32 %v988, %v851
        %v1144 = vadd.f32 %v1140, %v1142
        %v1145 = vrot.slane %v1144, 4
        %v1146 = vadd.f32 %v1144, %v1145
        %v1147 = vrot.slane %v1146, 2
        %v1148 = vadd.f32 %v1146, %v1147
        %v1149 = vrot.slane %v1148, 1
        %v1150 = vadd.f32 %v1148, %v1149
        %v1151 = vadd.f32 %v1141, %v1143
        %v1152 = vrot.slane %v1151, 4
        %v1153 = vadd.f32 %v1151, %v1152
        %v1154 = vrot.slane %v1153, 2
        %v1155 = vadd.f32 %v1153, %v1154
        %v1156 = vrot.slane %v1155, 1
        %v1157 = vadd.f32 %v1155, %v1156
        %v1158 = vmul.f32 %v1049, %v904
        %v1159 = vmul.f32 %v1078, %v905
        %v1160 = vmul.f32 %v1051, %v906
        %v1161 = vmul.f32 %v1080, %v907
        %v1162 = vadd.f32 %v1158, %v1160
        %v1163 = vrot.slane %v1162, 4
        %v1164 = vadd.f32 %v1162, %v1163
        %v1165 = vrot.slane %v1164, 2
        %v1166 = vadd.f32 %v1164, %v1165
        %v1167 = vrot.slane %v1166, 1
        %v1168 = vadd.f32 %v1166, %v1167
        %v1169 = vadd.f32 %v1159, %v1161
        %v1170 = vrot.slane %v1169, 4
        %v1171 = vadd.f32 %v1169, %v1170
        %v1172 = vrot.slane %v1171, 2
        %v1173 = vadd.f32 %v1171, %v1172
        %v1174 = vrot.slane %v1173, 1
        %v1175 = vadd.f32 %v1173, %v1174
        %v1176 = vmul.f32 %v1168, %v751
        %v1177 = vmul.f32 %v1175, %v752
        %v1178 = vmul.f32 %v1150, %v751
        %v1179 = vmul.f32 %v1157, %v752
        %v1182 = vrot.slane %v1178, 1
        %v1183 = vrot.slane %v1179, 1
        %v1186 = vadd.f32 %v1176, %v1182
        %v1187 = vadd.f32 %v1177, %v1183
        %v1188 = vmul.f32 %v962, %v848
        %v1189 = vmul.f32 %v991, %v849
        %v1190 = vmul.f32 %v964, %v850
        %v1191 = vmul.f32 %v993, %v851
        %v1192 = vadd.f32 %v1188, %v1190
        %v1193 = vrot.slane %v1192, 4
        %v1194 = vadd.f32 %v1192, %v1193
        %v1195 = vrot.slane %v1194, 2
        %v1196 = vadd.f32 %v1194, %v1195
        %v1197 = vrot.slane %v1196, 1
        %v1198 = vadd.f32 %v1196, %v1197
        %v1199 = vadd.f32 %v1189, %v1191
        %v1200 = vrot.slane %v1199, 4
        %v1201 = vadd.f32 %v1199, %v1200
        %v1202 = vrot.slane %v1201, 2
        %v1203 = vadd.f32 %v1201, %v1202
        %v1204 = vrot.slane %v1203, 1
        %v1205 = vadd.f32 %v1203, %v1204
        %v1206 = vmul.f32 %v1054, %v904
        %v1207 = vmul.f32 %v1083, %v905
        %v1208 = vmul.f32 %v1056, %v906
        %v1209 = vmul.f32 %v1085, %v907
        %v1210 = vadd.f32 %v1206, %v1208
        %v1211 = vrot.slane %v1210, 4
        %v1212 = vadd.f32 %v1210, %v1211
        %v1213 = vrot.slane %v1212, 2
        %v1214 = vadd.f32 %v1212, %v1213
        %v1215 = vrot.slane %v1214, 1
        %v1216 = vadd.f32 %v1214, %v1215
        %v1217 = vadd.f32 %v1207, %v1209
        %v1218 = vrot.slane %v1217, 4
        %v1219 = vadd.f32 %v1217, %v1218
        %v1220 = vrot.slane %v1219, 2
        %v1221 = vadd.f32 %v1219, %v1220
        %v1222 = vrot.slane %v1221, 1
        %v1223 = vadd.f32 %v1221, %v1222
        %v1224 = vmul.f32 %v1216, %v751
        %v1225 = vmul.f32 %v1223, %v752
        %v1226 = vmul.f32 %v1198, %v751
        %v1227 = vmul.f32 %v1205, %v752
        %v1230 = vrot.slane %v1226, 1
        %v1231 = vrot.slane %v1227, 1
        %v1234 = vadd.f32 %v1224, %v1230
        %v1235 = vadd.f32 %v1225, %v1231
        %v1236 = vmul.f32 %v967, %v848
        %v1237 = vmul.f32 %v996, %v849
        %v1238 = vmul.f32 %v969, %v850
        %v1239 = vmul.f32 %v998, %v851
        %v1240 = vadd.f32 %v1236, %v1238
        %v1241 = vrot.slane %v1240, 4
        %v1242 = vadd.f32 %v1240, %v1241
        %v1243 = vrot.slane %v1242, 2
        %v1244 = vadd.f32 %v1242, %v1243
        %v1245 = vrot.slane %v1244, 1
        %v1246 = vadd.f32 %v1244, %v1245
        %v1247 = vadd.f32 %v1237, %v1239
        %v1248 = vrot.slane %v1247, 4
        %v1249 = vadd.f32 %v1247, %v1248
        %v1250 = vrot.slane %v1249, 2
        %v1251 = vadd.f32 %v1249, %v1250
        %v1252 = vrot.slane %v1251, 1
        %v1253 = vadd.f32 %v1251, %v1252
        %v1254 = vmul.f32 %v1059, %v904
        %v1255 = vmul.f32 %v1088, %v905
        %v1256 = vmul.f32 %v1061, %v906
        %v1257 = vmul.f32 %v1090, %v907
        %v1258 = vadd.f32 %v1254, %v1256
        %v1259 = vrot.slane %v1258, 4
        %v1260 = vadd.f32 %v1258, %v1259
        %v1261 = vrot.slane %v1260, 2
        %v1262 = vadd.f32 %v1260, %v1261
        %v1263 = vrot.slane %v1262, 1
        %v1264 = vadd.f32 %v1262, %v1263
        %v1265 = vadd.f32 %v1255, %v1257
        %v1266 = vrot.slane %v1265, 4
        %v1267 = vadd.f32 %v1265, %v1266
        %v1268 = vrot.slane %v1267, 2
        %v1269 = vadd.f32 %v1267, %v1268
        %v1270 = vrot.slane %v1269, 1
        %v1271 = vadd.f32 %v1269, %v1270
        %v1272 = vmul.f32 %v1264, %v751
        %v1273 = vmul.f32 %v1271, %v752
        %v1274 = vmul.f32 %v1246, %v751
        %v1275 = vmul.f32 %v1253, %v752
        %v1278 = vrot.slane %v1274, 1
        %v1279 = vrot.slane %v1275, 1
        %v1282 = vadd.f32 %v1272, %v1278
        %v1283 = vadd.f32 %v1273, %v1279
        %v1286 = vrot.slane %v1138, 4
        %v1287 = vrot.slane %v1139, 4
        %v1292 = vrot.slane %v1186, 3
        %v1293 = vrot.slane %v1187, 3
        %v1298 = vrot.slane %v1234, 2
        %v1299 = vrot.slane %v1235, 2
        %v1304 = vrot.slane %v1282, 1
        %v1305 = vrot.slane %v1283, 1
        %v1308 = vsel %vm734, %v1286, %v1292
        %v1309 = vsel %vm734, %v1287, %v1293
        %v1310 = vsel %vm737, %v1308, %v1298
        %v1311 = vsel %vm737, %v1309, %v1299
        %v1312 = vsel %vm740, %v1310, %v1304
        %v1313 = vsel %vm740, %v1311, %v1305
        %v1316 = vrot.slane %v1313, 4
        %v1317 = vsel %vm746, %v1312, %v1316
        %s1319 = scalar_lea.vmem %s157, 8 [#allocation2]
        %1320 = vst [vmem:[%s1319] sm:$0xff] %v1317
        %s1321 = sand.u32 %s76, 1
        %s1322 = scalar_lea.sflag [#allocation3], %s1321
        %s1323 = sand.u32 %s76, 1
        %s1324 = smul.addr %s1323, 16
        %s1325 = scalar_lea.vmem [#allocation2], %s1324
        // Predicated region
        $region29: #{tpu_custom_call.1} parent=27 // pred_check
          %p1326 = pneg %p86
        $region30: #{tpu_custom_call.1} parent=27 // pred_check_branch
          %1328 = sbr.rel (%p1326) target = $region32
        $region31: #{tpu_custom_call.1} parent=27 // pred_region
          %s1329 = smul.u32 2, %s16
          %1331 = vsyncadd %s1322, 0
          %s1332 = smul.addr %s1329, 2
          %s1333 = smul.addr %s1332, 4
          %s1334 = scalar_lea.hbm %s2, %s1333
          %s1335 = sshll.u32 %s1325, 4
          %s1336 = int_to_ptr.vmem [resolvable:$true] %s1335
          %s1337 = sshll.u32 %s1334, 4
          %s1338 = int_to_ptr.hbm [resolvable:$true] %s1337
          %1343 = dma.vmem_to_hbm [thread:$0]  %s1336, 256, %s1338, %s1322, 128, 128, 8
        $region32: #{tpu_custom_call.1} parent=27 // pred_fallthru
          _
      $region28: #{tpu_custom_call.1} parent=5 // pred_fallthru
        _
      %p1344 = scmp.le.s32.totalorder 2, %s11
      // Predicated region
      $region33: #{tpu_custom_call.1} parent=5 // pred_check
        %p1345 = pneg %p1344
      $region34: #{tpu_custom_call.1} parent=5 // pred_check_branch
        %1347 = sbr.rel (%p1345) target = $region36
      $region35: #{tpu_custom_call.1} parent=5 // pred_region
        %s1348 = ssub.s32 %s11, 2
        // Predicated region
        $region37: #{tpu_custom_call.1} parent=35 // pred_check
          %p1349 = pneg %p92
        $region38: #{tpu_custom_call.1} parent=35 // pred_check_branch
          %1351 = sbr.rel (%p1349) target = $region40
        $region39: #{tpu_custom_call.1} parent=35 // pred_region
          %s1352 = sand.u32 %s77, 1
          %s1353 = scalar_lea.sflag [#allocation3], %s1352
          %s1354 = sand.u32 %s77, 1
          %s1355 = smul.addr %s1354, 16
          %s1356 = scalar_lea.vmem [#allocation2], %s1355
          %1358 = dma.done %s1353, 256
        $region40: #{tpu_custom_call.1} parent=35 // pred_fallthru
          _
      $region36: #{tpu_custom_call.1} parent=5 // pred_fallthru
        _
    $region6: #{tpu_custom_call.1} parent=1 // loop_footer
      %s15 = sadd.s32 1, %s11
    $region7: #{tpu_custom_call.1} parent=1 // loop_footer_branch
      %10 = sbr.rel target = $region3
    $region8: #{tpu_custom_call.1} parent=1 // loop_exit
      _
    %1359 = vsyncpa [#allocation3], 1
    %s1360 = scalar_lea.sflag [#allocation3], 1
    %1361 = vsyncpa %s1360, 1

</llo_original>
